<compile_context>
chip_gen: v6e
topology: v6e:2x2x1
jax: 0.10.0
libtpu: 0.0.40
codegen_flags: <defaults>
</compile_context>

<pallas_src>
import functools

import jax
import jax.numpy as jnp
from jax.experimental import pallas as pl
from jax.experimental.pallas import tpu as pltpu


# --------------------------------------------------------------------------
# Kernel
# --------------------------------------------------------------------------
def dtln_p2_kernel(y_ref, st_ref, pa_ref, pb_ref, pc_ref,
                   dec_ref, outst_ref,
                   state_sc, gx1_sc, h2_sc, *, t_total):
    """One TB-frame block per grid step.

    y_ref     : [TB, F]           frame slab (f32)
    st_ref    : [4, H]            initial (h1, c1, h2, c2) rows
    pa_ref    : [F + H + 3, E]    [wenc^T ; wd^T ; gamma ; beta ; bd]
    pb_ref    : [E + 3H + 2, 4H]  [Wih1^T ; Whh1^T ; Wih2^T ; Whh2^T ; b1 ; b2]
                                  (gate columns reordered to i, f, o, g)
    pc_ref    : [E, F]            wdec^T
    dec_ref   : [TB, F]           decoded frame slab
    outst_ref : [4, H]            final state (written once, last grid step)
    state_sc  : [4, H]   f32 VMEM carried LSTM state across grid steps
    gx1_sc    : [TB, 4H] f32 VMEM batched layer-1 input-side gates
    h2_sc     : [TB, H]  f32 VMEM per-frame layer-2 outputs for the mask dense
    """
    f32 = jnp.float32
    H = st_ref.shape[1]
    E, F = pc_ref.shape
    TB = y_ref.shape[0]
    mm_dtype = pa_ref.dtype              # matmul operand dtype (bf16 or f32)
    t = pl.program_id(0)

    # Seed the VMEM-resident state from the incoming state on the first block.
    @pl.when(t == 0)
    def _():
        state_sc[...] = st_ref[...].astype(f32)

    # ---------------- batched (non-recurrent) front end -------------------
    # encoder_conv1 (k=1, no bias): enc = y @ Wenc^T, M = TB.
    y = y_ref[...].astype(mm_dtype)                                  # [TB, F]
    wenc_t = pa_ref[0:F, :]                                          # [F, E]
    enc = jnp.dot(y, wenc_t, preferred_element_type=f32)             # [TB, E] f32

    # InstantLayerNormalization, per frame (row); two-pass variance matches the
    # module exactly and cannot go negative (no rsqrt NaN risk).
    mean = jnp.mean(enc, axis=-1, keepdims=True)
    sub = enc - mean
    var = jnp.mean(sub * sub, axis=-1, keepdims=True)
    inv_std = jax.lax.rsqrt(var + 1e-7)
    gamma = pa_ref[F + H:F + H + 1, :].astype(f32)                   # [1, E]
    beta = pa_ref[F + H + 1:F + H + 2, :].astype(f32)                # [1, E]
    norm = sub * inv_std * gamma + beta                              # [TB, E] f32

    # Packed LSTM weights (gate columns are i, f, o, g).
    w1x = pb_ref[0:E, :]                                             # [E, 4H]
    w1h = pb_ref[E:E + H, :]                                         # [H, 4H]
    w2x = pb_ref[E + H:E + 2 * H, :]                                 # [H, 4H]
    w2h = pb_ref[E + 2 * H:E + 3 * H, :]                             # [H, 4H]
    b1 = pb_ref[E + 3 * H:E + 3 * H + 1, :].astype(f32)              # [1, 4H]
    b2 = pb_ref[E + 3 * H + 1:E + 3 * H + 2, :].astype(f32)          # [1, 4H]

    # Layer-1 input-side gates for ALL frames in the block (state-independent),
    # hoisted out of the serial loop as a single M=TB matmul.
    gx1_sc[...] = jnp.dot(norm.astype(mm_dtype), w1x,
                          preferred_element_type=f32) + b1           # [TB, 4H]

    # ---------------- serial LSTM recurrence over the block ---------------
    h1_0 = state_sc[0:1, :]
    c1_0 = state_sc[1:2, :]
    h2_0 = state_sc[2:3, :]
    c2_0 = state_sc[3:4, :]

    def step(i, carry):
        h1, c1, h2, c2 = carry
        # Padded tail frames must not advance the carried state.
        valid = (t * TB + i) < t_total

        # Layer 1: precomputed input gates + recurrent contribution.
        g1 = gx1_sc[pl.ds(i, 1), :] + jnp.dot(
            h1.astype(mm_dtype), w1h, preferred_element_type=f32)    # [1, 4H]
        s1 = jax.nn.sigmoid(g1[:, 0:3 * H])        # i | f | o  (reordered cols)
        t1 = jnp.tanh(g1[:, 3 * H:4 * H])          # g
        c1n = s1[:, H:2 * H] * c1 + s1[:, 0:H] * t1
        h1n = s1[:, 2 * H:3 * H] * jnp.tanh(c1n)

        # Layer 2 (dropout is identity in eval): two small dots, no concat.
        g2 = (jnp.dot(h1n.astype(mm_dtype), w2x, preferred_element_type=f32)
              + jnp.dot(h2.astype(mm_dtype), w2h, preferred_element_type=f32)
              + b2)                                                   # [1, 4H]
        s2 = jax.nn.sigmoid(g2[:, 0:3 * H])
        t2 = jnp.tanh(g2[:, 3 * H:4 * H])
        c2n = s2[:, H:2 * H] * c2 + s2[:, 0:H] * t2
        h2n = s2[:, 2 * H:3 * H] * jnp.tanh(c2n)

        # Stash layer-2 output row for the batched mask matmul below.
        h2_sc[pl.ds(i, 1), :] = h2n

        h1 = jnp.where(valid, h1n, h1)
        c1 = jnp.where(valid, c1n, c1)
        h2 = jnp.where(valid, h2n, h2)
        c2 = jnp.where(valid, c2n, c2)
        return h1, c1, h2, c2

    h1f, c1f, h2f, c2f = jax.lax.fori_loop(0, TB, step,
                                           (h1_0, c1_0, h2_0, c2_0))

    state_sc[0:1, :] = h1f
    state_sc[1:2, :] = c1f
    state_sc[2:3, :] = h2f
    state_sc[3:4, :] = c2f

    # ---------------- batched (non-recurrent) back end ---------------------
    # dense + sigmoid mask on layer-2 outputs, applied to UN-normalized enc.
    wd_t = pa_ref[F:F + H, :]                                         # [H, E]
    bd = pa_ref[F + H + 2:F + H + 3, :].astype(f32)                   # [1, E]
    mask = jax.nn.sigmoid(
        jnp.dot(h2_sc[...].astype(mm_dtype), wd_t,
                preferred_element_type=f32) + bd)                     # [TB, E]
    est = mask * enc                                                  # [TB, E]

    # decoder_conv1 (k=1, no bias): dec = est @ Wdec^T, M = TB.
    dec = jnp.dot(est.astype(mm_dtype), pc_ref[...],
                  preferred_element_type=f32)                         # [TB, F]
    dec_ref[...] = dec.astype(dec_ref.dtype)

    # Final carried state, written once at the last grid step.
    @pl.when(t == pl.num_programs(0) - 1)
    def _():
        outst_ref[...] = state_sc[...]


# --------------------------------------------------------------------------
# Offline weight packing (hoisted out of the per-frame path)
# --------------------------------------------------------------------------
def _reorder_gates(w):
    """PyTorch LSTM gate-row order (i, f, g, o) -> (i, f, o, g)."""
    h = w.shape[0] // 4
    return jnp.concatenate([w[0:2 * h], w[3 * h:4 * h], w[2 * h:3 * h]], axis=0)


def pack_dtln_params(params, matmul_dtype=jnp.bfloat16):
    """Pack / transpose / gate-reorder all weights ONCE."""
    E, F = params["wenc"].shape
    H = params["whh1"].shape[1]
    pa = jnp.concatenate([
        params["wenc"].T,                                 # [F, E]
        params["wd"].T,                                   # [H, E]
        params["gamma"].reshape(1, E),
        params["beta"].reshape(1, E),
        params["bd"].reshape(1, E),
    ], axis=0).astype(matmul_dtype)                       # [F+H+3, E]
    b1 = _reorder_gates((params["bih1"] + params["bhh1"]).reshape(4 * H, 1)).T
    b2 = _reorder_gates((params["bih2"] + params["bhh2"]).reshape(4 * H, 1)).T
    pb = jnp.concatenate([
        _reorder_gates(params["wih1"]).T,                 # [E, 4H]
        _reorder_gates(params["whh1"]).T,                 # [H, 4H]
        _reorder_gates(params["wih2"]).T,                 # [H, 4H]
        _reorder_gates(params["whh2"]).T,                 # [H, 4H]
        b1,                                               # [1, 4H]
        b2,                                               # [1, 4H]
    ], axis=0).astype(matmul_dtype)                       # [E+3H+2, 4H]
    pc = params["wdec"].T.astype(matmul_dtype)            # [E, F]
    return pa, pb, pc


# --------------------------------------------------------------------------
# Wrapper
# --------------------------------------------------------------------------
DEFAULT_TB = 64   # frames per grid step for long streams


@functools.partial(jax.jit, static_argnames=("tb",))
def _dtln_p2_call(frames, st, pa, pb, pc, tb=DEFAULT_TB):
    """frames: [T, F], st: [4, H] -> (dec [T, F] f32, out_state [4, H] f32)."""
    T, F = frames.shape
    H = st.shape[1]

    TB = min(tb, T)
    if T > TB and TB % 8 != 0:
        raise ValueError("tb must be a multiple of 8 when T > tb")
    num_blocks = -(-T // TB)
    T_pad = num_blocks * TB

    frames_f = frames.astype(jnp.float32)
    if T_pad != T:
        frames_f = jnp.pad(frames_f, ((0, T_pad - T), (0, 0)))
    st = st.astype(jnp.float32)

    grid_spec = pltpu.PrefetchScalarGridSpec(
        num_scalar_prefetch=0,
        grid=(num_blocks,),
        in_specs=[
            pl.BlockSpec((TB, F), lambda t: (t, 0)),      # frame slab
            pl.BlockSpec((4, H), lambda t: (0, 0)),       # initial state
            pl.BlockSpec(pa.shape, lambda t: (0, 0)),     # packed weights A
            pl.BlockSpec(pb.shape, lambda t: (0, 0)),     # packed weights B
            pl.BlockSpec(pc.shape, lambda t: (0, 0)),     # packed weights C
        ],
        out_specs=(
            pl.BlockSpec((TB, F), lambda t: (t, 0)),      # decoded slab
            pl.BlockSpec((4, H), lambda t: (0, 0)),       # final state
        ),
        scratch_shapes=[
            pltpu.VMEM((4, H), jnp.float32),              # carried LSTM state
            pltpu.VMEM((TB, 4 * H), jnp.float32),         # layer-1 input gates
            pltpu.VMEM((TB, H), jnp.float32),             # layer-2 outputs
        ],
    )
    dec_pad, outst = pl.pallas_call(
        functools.partial(dtln_p2_kernel, t_total=T),
        out_shape=(jax.ShapeDtypeStruct((T_pad, F), jnp.float32),
                   jax.ShapeDtypeStruct((4, H), jnp.float32)),
        grid_spec=grid_spec,
        compiler_params=pltpu.CompilerParams(
            dimension_semantics=("arbitrary",)),          # serial recurrence
    )(frames_f, st, pa, pb, pc)
    return dec_pad[:T], outst


def dtln_p2_forward(y1, in_states, packed):
    """Single-frame forward, matching Pytorch_DTLN_P2_stateful.forward.

    y1: [1, F, 1], in_states: [1, 4, H] -> (decoded [1, F, 1], out_states [1, 4, H])
    """
    pa, pb, pc = packed
    F = y1.shape[1]
    H = in_states.shape[2]
    dec, outst = _dtln_p2_call(y1.reshape(1, F), in_states.reshape(4, H),
                               pa, pb, pc, tb=1)
    return dec.reshape(1, F, 1), outst.reshape(1, 4, H)


def dtln_p2_forward_streaming(frames, in_states, packed, tb=DEFAULT_TB):
    """T frames in ONE kernel launch, state carried in VMEM between blocks.

    frames: [T, F], in_states: [1, 4, H] -> (decoded [T, F], out_states [1, 4, H])
    """
    pa, pb, pc = packed
    H = in_states.shape[2]
    dec, outst = _dtln_p2_call(frames, in_states.reshape(4, H), pa, pb, pc, tb=tb)
    return dec, outst.reshape(1, 4, H)


# --------------------------------------------------------------------------
# Pure-JAX reference (mirrors the PyTorch module exactly, f32)
# --------------------------------------------------------------------------
def dtln_p2_reference(y1, in_states, params):
    F = y1.shape[1]
    H = in_states.shape[2]
    with jax.default_matmul_precision("highest"):
        y = y1.reshape(1, F)
        enc = y @ params["wenc"].T
        mean = jnp.mean(enc)
        sub = enc - mean
        var = jnp.mean(jnp.square(sub))
        norm = (sub / jnp.sqrt(var + 1e-7)) * params["gamma"].reshape(1, -1) \
               + params["beta"].reshape(1, -1)

        st = in_states.reshape(4, H)
        h1, c1, h2, c2 = st[0:1], st[1:2], st[2:3], st[3:4]

        def lstm(x, h, c, wih, whh, bih, bhh):
            g = x @ wih.T + bih + h @ whh.T + bhh
            i = jax.nn.sigmoid(g[:, 0:H])
            f = jax.nn.sigmoid(g[:, H:2 * H])
            gg = jnp.tanh(g[:, 2 * H:3 * H])
            o = jax.nn.sigmoid(g[:, 3 * H:4 * H])
            cn = f * c + i * gg
            return o * jnp.tanh(cn), cn

        h1n, c1n = lstm(norm, h1, c1, params["wih1"], params["whh1"],
                        params["bih1"], params["bhh1"])
        h2n, c2n = lstm(h1n, h2, c2, params["wih2"], params["whh2"],
                        params["bih2"], params["bhh2"])
        mask = jax.nn.sigmoid(h2n @ params["wd"].T + params["bd"])
        est = mask * enc
        dec = est @ params["wdec"].T
    out_states = jnp.concatenate([h1n, c1n, h2n, c2n], axis=0).reshape(1, 4, H)
    return dec.reshape(1, F, 1), out_states


def _run_reference_stream(frames, in_states, params):
    st = in_states
    outs = []
    for ti in range(frames.shape[0]):
        d, st = dtln_p2_reference(frames[ti].reshape(1, -1, 1), st, params)
        outs.append(d.reshape(1, -1))
    return jnp.concatenate(outs, axis=0), st


def _max_err(a, b):
    return float(jnp.max(jnp.abs(a - b)))


def _mean_err(a, b):
    return float(jnp.mean(jnp.abs(a - b)))


# --------------------------------------------------------------------------
# Test
# --------------------------------------------------------------------------
if __name__ == "__main__":
    # Small, lane-aligned shapes consistent with the module
    # (real defaults: frame_len=512, encoder_size=256, hidden_size=128).
    F, E, H = 128, 128, 128

    key = jax.random.PRNGKey(0)
    ks = jax.random.split(key, 20)

    def rnd(k, shape, scale=0.1):
        return jax.random.normal(k, shape, dtype=jnp.float32) * scale

    params = {
        "wenc": rnd(ks[0], (E, F)),        # Conv1d weight [out, in] (k=1 squeezed)
        "gamma": 1.0 + rnd(ks[1], (E,)),
        "beta": rnd(ks[2], (E,)),
        "wih1": rnd(ks[3], (4 * H, E)),
        "whh1": rnd(ks[4], (4 * H, H)),
        "bih1": rnd(ks[5], (4 * H,)),
        "bhh1": rnd(ks[6], (4 * H,)),
        "wih2": rnd(ks[7], (4 * H, H)),
        "whh2": rnd(ks[8], (4 * H, H)),
        "bih2": rnd(ks[9], (4 * H,)),
        "bhh2": rnd(ks[10], (4 * H,)),
        "wd": rnd(ks[11], (E, H)),
        "bd": rnd(ks[12], (E,)),
        "wdec": rnd(ks[13], (F, E)),
    }

    packed_f32 = pack_dtln_params(params, matmul_dtype=jnp.float32)
    packed_bf16 = pack_dtln_params(params)          # production config (bf16 MXU operands)
    jax.block_until_ready((packed_f32, packed_bf16))

    # --- single-frame forward (module semantics), f32 pack: tight check ---
    y1 = rnd(ks[14], (1, F, 1), scale=1.0)
    in_states = rnd(ks[15], (1, 4, H), scale=0.5)

    dec, out_states = dtln_p2_forward(y1, in_states, packed_f32)
    jax.block_until_ready((dec, out_states))
    dec_ref, out_states_ref = dtln_p2_reference(y1, in_states, params)
    assert dec.shape == (1, F, 1) and out_states.shape == (1, 4, H)
    assert _max_err(dec, dec_ref) < 2e-5, _max_err(dec, dec_ref)
    assert _max_err(out_states, out_states_ref) < 2e-5, \
        _max_err(out_states, out_states_ref)

    # --- streaming, multi-block + ragged tail (T=20, TB=8 -> 3 blocks, 4 pad
    #     frames), f32 pack: tight check of blocking / padding / state carry ---
    T = 20
    frames = rnd(ks[16], (T, F), scale=1.0)
    dec_ref_s, st_ref_s = _run_reference_stream(frames, in_states, params)

    dec_s, st_s = dtln_p2_forward_streaming(frames, in_states, packed_f32, tb=8)
    jax.block_until_ready((dec_s, st_s))
    assert dec_s.shape == (T, F) and st_s.shape == (1, 4, H)
    assert _max_err(dec_s, dec_ref_s) < 2e-4, _max_err(dec_s, dec_ref_s)
    assert _max_err(st_s, st_ref_s) < 2e-4, _max_err(st_s, st_ref_s)

    # --- streaming, bf16 matmul operands (perf config): loose tolerance ---
    dec_b, st_b = dtln_p2_forward_streaming(frames, in_states, packed_bf16, tb=8)
    jax.block_until_ready((dec_b, st_b))
    assert _max_err(dec_b, dec_ref_s) < 5e-2, _max_err(dec_b, dec_ref_s)
    assert _mean_err(dec_b, dec_ref_s) < 1e-2, _mean_err(dec_b, dec_ref_s)
    assert _max_err(st_b, st_ref_s) < 5e-2, _max_err(st_b, st_ref_s)

    print("KERNEL_OK")
</pallas_src>

<mosaic_0001>
module attributes {stable_mosaic.version = 11 : i64} {
  func.func @dtln_p2_kernel(%arg0: i32, %arg1: memref<1x128xf32, #tpu.memory_space<vmem>>, %arg2: memref<4x128xf32, #tpu.memory_space<vmem>>, %arg3: memref<259x128xf32, #tpu.memory_space<vmem>>, %arg4: memref<514x512xf32, #tpu.memory_space<vmem>>, %arg5: memref<128x128xf32, #tpu.memory_space<vmem>>, %arg6: memref<1x128xf32, #tpu.memory_space<vmem>>, %arg7: memref<4x128xf32, #tpu.memory_space<vmem>>, %arg8: memref<4x128xf32, #tpu.memory_space<vmem>>, %arg9: memref<1x512xf32, #tpu.memory_space<vmem>>, %arg10: memref<1x128xf32, #tpu.memory_space<vmem>>) attributes {dimension_semantics = [#tpu.dimension_semantics<arbitrary>], iteration_bounds = array<i64: 1>, scalar_prefetch = 0 : i64, scratch_operands = 3 : i64, tpu.core_type = #tpu.core_type<tc>, window_params = [{transform_indices = @transform_0, window_bounds = array<i64: 1, 128>}, {pipeline_mode = #tpu.pipeline_mode<synchronous>, transform_indices = @transform_1, window_bounds = array<i64: 4, 128>}, {pipeline_mode = #tpu.pipeline_mode<synchronous>, transform_indices = @transform_2, window_bounds = array<i64: 259, 128>}, {pipeline_mode = #tpu.pipeline_mode<synchronous>, transform_indices = @transform_3, window_bounds = array<i64: 514, 512>}, {pipeline_mode = #tpu.pipeline_mode<synchronous>, transform_indices = @transform_4, window_bounds = array<i64: 128, 128>}, {transform_indices = @transform_5, window_bounds = array<i64: 1, 128>}, {pipeline_mode = #tpu.pipeline_mode<synchronous>, transform_indices = @transform_6, window_bounds = array<i64: 4, 128>}]} {
    %c0_i32 = arith.constant 0 : i32
    %0 = arith.cmpi eq, %arg0, %c0_i32 : i32
    %1 = arith.extui %0 : i1 to i32
    %c0_i32_0 = arith.constant 0 : i32
    %2 = arith.cmpi ne, %1, %c0_i32_0 : i32
    scf.if %2 {
      %c0_59 = arith.constant 0 : index
      %c0_60 = arith.constant 0 : index
      %109 = vector.load %arg2[%c0_59, %c0_60] : memref<4x128xf32, #tpu.memory_space<vmem>>, vector<4x128xf32>
      %c0_61 = arith.constant 0 : index
      %c0_62 = arith.constant 0 : index
      %110 = vector.load %arg8[%c0_61, %c0_62] : memref<4x128xf32, #tpu.memory_space<vmem>>, vector<4x128xf32>
      tpu.vector_store %arg8[%c0_61, %c0_62], %109 {strides = array<i32>} : memref<4x128xf32, #tpu.memory_space<vmem>>, vector<4x128xf32>,
    } else {
    }
    %c0 = arith.constant 0 : index
    %c0_1 = arith.constant 0 : index
    %3 = vector.load %arg1[%c0, %c0_1] : memref<1x128xf32, #tpu.memory_space<vmem>>, vector<1x128xf32>
    %c0_2 = arith.constant 0 : index
    %c0_3 = arith.constant 0 : index
    %4 = vector.load %arg3[%c0_2, %c0_3] : memref<259x128xf32, #tpu.memory_space<vmem>>, vector<128x128xf32>
    %cst = arith.constant dense<0.000000e+00> : vector<1x128xf32>
    %5 = tpu.matmul %3, %4, %cst {dimension_numbers = #tpu.dot_dimension_numbers<[1], [0], [0], [1], [0, 0, 1, 1], [], []>} : vector<1x128xf32>, vector<128x128xf32>, vector<1x128xf32> -> vector<1x128xf32>
    %cst_4 = arith.constant dense<0.000000e+00> : vector<1xf32>
    %6 = vector.multi_reduction <add>, %5, %cst_4 [1] : vector<1x128xf32> to vector<1xf32>
    %7 = vector.shape_cast %6 : vector<1xf32> to vector<1x1xf32>
    %cst_5 = arith.constant 1.280000e+02 : f32
    %8 = vector.broadcast %cst_5 : f32 to vector<1x1xf32>
    %9 = arith.divf %7, %8 : vector<1x1xf32>
    %10 = vector.broadcast %9 : vector<1x1xf32> to vector<1x128xf32>
    %11 = arith.subf %5, %10 : vector<1x128xf32>
    %12 = arith.mulf %11, %11 : vector<1x128xf32>
    %cst_6 = arith.constant dense<0.000000e+00> : vector<1xf32>
    %13 = vector.multi_reduction <add>, %12, %cst_6 [1] : vector<1x128xf32> to vector<1xf32>
    %14 = vector.shape_cast %13 : vector<1xf32> to vector<1x1xf32>
    %cst_7 = arith.constant 1.280000e+02 : f32
    %15 = vector.broadcast %cst_7 : f32 to vector<1x1xf32>
    %16 = arith.divf %14, %15 : vector<1x1xf32>
    %cst_8 = arith.constant 1.000000e-07 : f32
    %17 = vector.broadcast %cst_8 : f32 to vector<1x1xf32>
    %18 = arith.addf %16, %17 : vector<1x1xf32>
    %19 = math.rsqrt %18 : vector<1x1xf32>
    %c256 = arith.constant 256 : index
    %c0_9 = arith.constant 0 : index
    %20 = vector.load %arg3[%c256, %c0_9] : memref<259x128xf32, #tpu.memory_space<vmem>>, vector<1x128xf32>
    %c257 = arith.constant 257 : index
    %c0_10 = arith.constant 0 : index
    %21 = vector.load %arg3[%c257, %c0_10] : memref<259x128xf32, #tpu.memory_space<vmem>>, vector<1x128xf32>
    %22 = vector.broadcast %19 : vector<1x1xf32> to vector<1x128xf32>
    %23 = arith.mulf %11, %22 : vector<1x128xf32>
    %24 = arith.mulf %23, %20 : vector<1x128xf32>
    %25 = arith.addf %24, %21 : vector<1x128xf32>
    %c0_11 = arith.constant 0 : index
    %c0_12 = arith.constant 0 : index
    %26 = vector.load %arg4[%c0_11, %c0_12] : memref<514x512xf32, #tpu.memory_space<vmem>>, vector<128x512xf32>
    %c128 = arith.constant 128 : index
    %c0_13 = arith.constant 0 : index
    %27 = vector.load %arg4[%c128, %c0_13] : memref<514x512xf32, #tpu.memory_space<vmem>>, vector<128x512xf32>
    %c256_14 = arith.constant 256 : index
    %c0_15 = arith.constant 0 : index
    %28 = vector.load %arg4[%c256_14, %c0_15] : memref<514x512xf32, #tpu.memory_space<vmem>>, vector<128x512xf32>
    %c384 = arith.constant 384 : index
    %c0_16 = arith.constant 0 : index
    %29 = vector.load %arg4[%c384, %c0_16] : memref<514x512xf32, #tpu.memory_space<vmem>>, vector<128x512xf32>
    %c512 = arith.constant 512 : index
    %c0_17 = arith.constant 0 : index
    %30 = vector.load %arg4[%c512, %c0_17] : memref<514x512xf32, #tpu.memory_space<vmem>>, vector<1x512xf32>
    %c513 = arith.constant 513 : index
    %c0_18 = arith.constant 0 : index
    %31 = vector.load %arg4[%c513, %c0_18] : memref<514x512xf32, #tpu.memory_space<vmem>>, vector<1x512xf32>
    %cst_19 = arith.constant dense<0.000000e+00> : vector<1x512xf32>
    %32 = tpu.matmul %25, %26, %cst_19 {dimension_numbers = #tpu.dot_dimension_numbers<[1], [0], [0], [1], [0, 0, 1, 1], [], []>} : vector<1x128xf32>, vector<128x512xf32>, vector<1x512xf32> -> vector<1x512xf32>
    %33 = arith.addf %32, %30 : vector<1x512xf32>
    %c0_20 = arith.constant 0 : index
    %c0_21 = arith.constant 0 : index
    %34 = vector.load %arg9[%c0_20, %c0_21] : memref<1x512xf32, #tpu.memory_space<vmem>>, vector<1x512xf32>
    tpu.vector_store %arg9[%c0_20, %c0_21], %33 {strides = array<i32>} : memref<1x512xf32, #tpu.memory_space<vmem>>, vector<1x512xf32>,
    %c0_22 = arith.constant 0 : index
    %c0_23 = arith.constant 0 : index
    %35 = vector.load %arg8[%c0_22, %c0_23] : memref<4x128xf32, #tpu.memory_space<vmem>>, vector<1x128xf32>
    %c1 = arith.constant 1 : index
    %c0_24 = arith.constant 0 : index
    %36 = vector.load %arg8[%c1, %c0_24] : memref<4x128xf32, #tpu.memory_space<vmem>>, vector<1x128xf32>
    %c2 = arith.constant 2 : index
    %c0_25 = arith.constant 0 : index
    %37 = vector.load %arg8[%c2, %c0_25] : memref<4x128xf32, #tpu.memory_space<vmem>>, vector<1x128xf32>
    %c3 = arith.constant 3 : index
    %c0_26 = arith.constant 0 : index
    %38 = vector.load %arg8[%c3, %c0_26] : memref<4x128xf32, #tpu.memory_space<vmem>>, vector<1x128xf32>
    %c0_i32_27 = arith.constant 0 : i32
    %c1_i32 = arith.constant 1 : i32
    %39 = arith.muli %arg0, %c1_i32 : i32
    %40 = arith.addi %39, %c0_i32_27 : i32
    %c1_i32_28 = arith.constant 1 : i32
    %41 = arith.cmpi slt, %40, %c1_i32_28 : i32
    %42 = arith.index_cast %c0_i32_27 : i32 to index
    %c0_29 = arith.constant 0 : index
    %43 = vector.load %arg9[%42, %c0_29] : memref<1x512xf32, #tpu.memory_space<vmem>>, vector<1x512xf32>
    %cst_30 = arith.constant dense<0.000000e+00> : vector<1x512xf32>
    %44 = tpu.matmul %35, %27, %cst_30 {dimension_numbers = #tpu.dot_dimension_numbers<[1], [0], [0], [1], [0, 0, 1, 1], [], []>} : vector<1x128xf32>, vector<128x512xf32>, vector<1x512xf32> -> vector<1x512xf32>
    %45 = arith.addf %43, %44 : vector<1x512xf32>
    %46 = vector.extract_strided_slice %45 {offsets = [0, 0], sizes = [1, 384], strides = [1, 1]} : vector<1x512xf32> to vector<1x384xf32>
    %47 = arith.negf %46 : vector<1x384xf32>
    %48 = math.exp %47 : vector<1x384xf32>
    %cst_31 = arith.constant 1.000000e+00 : f32
    %49 = vector.broadcast %cst_31 : f32 to vector<1x384xf32>
    %50 = arith.addf %49, %48 : vector<1x384xf32>
    %51 = arith.divf %49, %50 : vector<1x384xf32>
    %52 = vector.extract_strided_slice %45 {offsets = [0, 384], sizes = [1, 128], strides = [1, 1]} : vector<1x512xf32> to vector<1x128xf32>
    %53 = math.tanh %52 : vector<1x128xf32>
    %54 = vector.extract_strided_slice %51 {offsets = [0, 128], sizes = [1, 128], strides = [1, 1]} : vector<1x384xf32> to vector<1x128xf32>
    %55 = arith.mulf %54, %36 : vector<1x128xf32>
    %56 = vector.extract_strided_slice %51 {offsets = [0, 0], sizes = [1, 128], strides = [1, 1]} : vector<1x384xf32> to vector<1x128xf32>
    %57 = arith.mulf %56, %53 : vector<1x128xf32>
    %58 = arith.addf %55, %57 : vector<1x128xf32>
    %59 = vector.extract_strided_slice %51 {offsets = [0, 256], sizes = [1, 128], strides = [1, 1]} : vector<1x384xf32> to vector<1x128xf32>
    %60 = math.tanh %58 : vector<1x128xf32>
    %61 = arith.mulf %59, %60 : vector<1x128xf32>
    %cst_32 = arith.constant dense<0.000000e+00> : vector<1x512xf32>
    %62 = tpu.matmul %61, %28, %cst_32 {dimension_numbers = #tpu.dot_dimension_numbers<[1], [0], [0], [1], [0, 0, 1, 1], [], []>} : vector<1x128xf32>, vector<128x512xf32>, vector<1x512xf32> -> vector<1x512xf32>
    %cst_33 = arith.constant dense<0.000000e+00> : vector<1x512xf32>
    %63 = tpu.matmul %37, %29, %cst_33 {dimension_numbers = #tpu.dot_dimension_numbers<[1], [0], [0], [1], [0, 0, 1, 1], [], []>} : vector<1x128xf32>, vector<128x512xf32>, vector<1x512xf32> -> vector<1x512xf32>
    %64 = arith.addf %62, %63 : vector<1x512xf32>
    %65 = arith.addf %64, %31 : vector<1x512xf32>
    %66 = vector.extract_strided_slice %65 {offsets = [0, 0], sizes = [1, 384], strides = [1, 1]} : vector<1x512xf32> to vector<1x384xf32>
    %67 = arith.negf %66 : vector<1x384xf32>
    %68 = math.exp %67 : vector<1x384xf32>
    %cst_34 = arith.constant 1.000000e+00 : f32
    %69 = vector.broadcast %cst_34 : f32 to vector<1x384xf32>
    %70 = arith.addf %69, %68 : vector<1x384xf32>
    %71 = arith.divf %69, %70 : vector<1x384xf32>
    %72 = vector.extract_strided_slice %65 {offsets = [0, 384], sizes = [1, 128], strides = [1, 1]} : vector<1x512xf32> to vector<1x128xf32>
    %73 = math.tanh %72 : vector<1x128xf32>
    %74 = vector.extract_strided_slice %71 {offsets = [0, 128], sizes = [1, 128], strides = [1, 1]} : vector<1x384xf32> to vector<1x128xf32>
    %75 = arith.mulf %74, %38 : vector<1x128xf32>
    %76 = vector.extract_strided_slice %71 {offsets = [0, 0], sizes = [1, 128], strides = [1, 1]} : vector<1x384xf32> to vector<1x128xf32>
    %77 = arith.mulf %76, %73 : vector<1x128xf32>
    %78 = arith.addf %75, %77 : vector<1x128xf32>
    %79 = vector.extract_strided_slice %71 {offsets = [0, 256], sizes = [1, 128], strides = [1, 1]} : vector<1x384xf32> to vector<1x128xf32>
    %80 = math.tanh %78 : vector<1x128xf32>
    %81 = arith.mulf %79, %80 : vector<1x128xf32>
    %82 = arith.index_cast %c0_i32_27 : i32 to index
    %c0_35 = arith.constant 0 : index
    %83 = vector.load %arg10[%82, %c0_35] : memref<1x128xf32, #tpu.memory_space<vmem>>, vector<1x128xf32>
    tpu.vector_store %arg10[%82, %c0_35], %81 {strides = array<i32>} : memref<1x128xf32, #tpu.memory_space<vmem>>, vector<1x128xf32>,
    %84 = arith.select %41, %61, %35 : vector<1x128xf32>
    %85 = arith.select %41, %58, %36 : vector<1x128xf32>
    %86 = arith.select %41, %81, %37 : vector<1x128xf32>
    %87 = arith.select %41, %78, %38 : vector<1x128xf32>
    %c1_i32_36 = arith.constant 1 : i32
    %c0_37 = arith.constant 0 : index
    %c0_38 = arith.constant 0 : index
    %88 = vector.load %arg8[%c0_37, %c0_38] : memref<4x128xf32, #tpu.memory_space<vmem>>, vector<1x128xf32>
    tpu.vector_store %arg8[%c0_37, %c0_38], %84 {strides = array<i32>} : memref<4x128xf32, #tpu.memory_space<vmem>>, vector<1x128xf32>,
    %c1_39 = arith.constant 1 : index
    %c0_40 = arith.constant 0 : index
    %89 = vector.load %arg8[%c1_39, %c0_40] : memref<4x128xf32, #tpu.memory_space<vmem>>, vector<1x128xf32>
    tpu.vector_store %arg8[%c1_39, %c0_40], %85 {strides = array<i32>} : memref<4x128xf32, #tpu.memory_space<vmem>>, vector<1x128xf32>,
    %c2_41 = arith.constant 2 : index
    %c0_42 = arith.constant 0 : index
    %90 = vector.load %arg8[%c2_41, %c0_42] : memref<4x128xf32, #tpu.memory_space<vmem>>, vector<1x128xf32>
    tpu.vector_store %arg8[%c2_41, %c0_42], %86 {strides = array<i32>} : memref<4x128xf32, #tpu.memory_space<vmem>>, vector<1x128xf32>,
    %c3_43 = arith.constant 3 : index
    %c0_44 = arith.constant 0 : index
    %91 = vector.load %arg8[%c3_43, %c0_44] : memref<4x128xf32, #tpu.memory_space<vmem>>, vector<1x128xf32>
    tpu.vector_store %arg8[%c3_43, %c0_44], %87 {strides = array<i32>} : memref<4x128xf32, #tpu.memory_space<vmem>>, vector<1x128xf32>,
    %c128_45 = arith.constant 128 : index
    %c0_46 = arith.constant 0 : index
    %92 = vector.load %arg3[%c128_45, %c0_46] : memref<259x128xf32, #tpu.memory_space<vmem>>, vector<128x128xf32>
    %c258 = arith.constant 258 : index
    %c0_47 = arith.constant 0 : index
    %93 = vector.load %arg3[%c258, %c0_47] : memref<259x128xf32, #tpu.memory_space<vmem>>, vector<1x128xf32>
    %c0_48 = arith.constant 0 : index
    %c0_49 = arith.constant 0 : index
    %94 = vector.load %arg10[%c0_48, %c0_49] : memref<1x128xf32, #tpu.memory_space<vmem>>, vector<1x128xf32>
    %cst_50 = arith.constant dense<0.000000e+00> : vector<1x128xf32>
    %95 = tpu.matmul %94, %92, %cst_50 {dimension_numbers = #tpu.dot_dimension_numbers<[1], [0], [0], [1], [0, 0, 1, 1], [], []>} : vector<1x128xf32>, vector<128x128xf32>, vector<1x128xf32> -> vector<1x128xf32>
    %96 = arith.addf %95, %93 : vector<1x128xf32>
    %97 = arith.negf %96 : vector<1x128xf32>
    %98 = math.exp %97 : vector<1x128xf32>
    %cst_51 = arith.constant 1.000000e+00 : f32
    %99 = vector.broadcast %cst_51 : f32 to vector<1x128xf32>
    %100 = arith.addf %99, %98 : vector<1x128xf32>
    %101 = arith.divf %99, %100 : vector<1x128xf32>
    %102 = arith.mulf %101, %5 : vector<1x128xf32>
    %c0_52 = arith.constant 0 : index
    %c0_53 = arith.constant 0 : index
    %103 = vector.load %arg5[%c0_52, %c0_53] : memref<128x128xf32, #tpu.memory_space<vmem>>, vector<128x128xf32>
    %cst_54 = arith.constant dense<0.000000e+00> : vector<1x128xf32>
    %104 = tpu.matmul %102, %103, %cst_54 {dimension_numbers = #tpu.dot_dimension_numbers<[1], [0], [0], [1], [0, 0, 1, 1], [], []>} : vector<1x128xf32>, vector<128x128xf32>, vector<1x128xf32> -> vector<1x128xf32>
    %c0_55 = arith.constant 0 : index
    %c0_56 = arith.constant 0 : index
    %105 = vector.load %arg6[%c0_55, %c0_56] : memref<1x128xf32, #tpu.memory_space<vmem>>, vector<1x128xf32>
    tpu.vector_store %arg6[%c0_55, %c0_56], %104 {strides = array<i32>} : memref<1x128xf32, #tpu.memory_space<vmem>>, vector<1x128xf32>,
    %c0_i32_57 = arith.constant 0 : i32
    %106 = arith.cmpi eq, %arg0, %c0_i32_57 : i32
    %107 = arith.extui %106 : i1 to i32
    %c0_i32_58 = arith.constant 0 : i32
    %108 = arith.cmpi ne, %107, %c0_i32_58 : i32
    scf.if %108 {
      %c0_59 = arith.constant 0 : index
      %c0_60 = arith.constant 0 : index
      %109 = vector.load %arg8[%c0_59, %c0_60] : memref<4x128xf32, #tpu.memory_space<vmem>>, vector<4x128xf32>
      %c0_61 = arith.constant 0 : index
      %c0_62 = arith.constant 0 : index
      %110 = vector.load %arg7[%c0_61, %c0_62] : memref<4x128xf32, #tpu.memory_space<vmem>>, vector<4x128xf32>
      tpu.vector_store %arg7[%c0_61, %c0_62], %109 {strides = array<i32>} : memref<4x128xf32, #tpu.memory_space<vmem>>, vector<4x128xf32>,
    } else {
    }
    return
  }
  func.func @transform_0(%arg0: i32) -> (i32, i32) {
    %c0_i32 = arith.constant 0 : i32
    %c0_i32_0 = arith.constant 0 : i32
    return %arg0, %c0_i32 : i32, i32
  }
  func.func @transform_1(%arg0: i32) -> (i32, i32) {
    %c0_i32 = arith.constant 0 : i32
    %c0_i32_0 = arith.constant 0 : i32
    %c0_i32_1 = arith.constant 0 : i32
    return %c0_i32, %c0_i32_0 : i32, i32
  }
  func.func @transform_2(%arg0: i32) -> (i32, i32) {
    %c0_i32 = arith.constant 0 : i32
    %c0_i32_0 = arith.constant 0 : i32
    %c0_i32_1 = arith.constant 0 : i32
    return %c0_i32, %c0_i32_0 : i32, i32
  }
  func.func @transform_3(%arg0: i32) -> (i32, i32) {
    %c0_i32 = arith.constant 0 : i32
    %c0_i32_0 = arith.constant 0 : i32
    %c0_i32_1 = arith.constant 0 : i32
    return %c0_i32, %c0_i32_0 : i32, i32
  }
  func.func @transform_4(%arg0: i32) -> (i32, i32) {
    %c0_i32 = arith.constant 0 : i32
    %c0_i32_0 = arith.constant 0 : i32
    %c0_i32_1 = arith.constant 0 : i32
    return %c0_i32, %c0_i32_0 : i32, i32
  }
  func.func @transform_5(%arg0: i32) -> (i32, i32) {
    %c0_i32 = arith.constant 0 : i32
    %c0_i32_0 = arith.constant 0 : i32
    return %arg0, %c0_i32 : i32, i32
  }
  func.func @transform_6(%arg0: i32) -> (i32, i32) {
    %c0_i32 = arith.constant 0 : i32
    %c0_i32_0 = arith.constant 0 : i32
    %c0_i32_1 = arith.constant 0 : i32
    return %c0_i32, %c0_i32_0 : i32, i32
  }
}

</mosaic_0001>

<llo_original>
// kernel: _dtln_p2_call.1
$region0: #{_dtln_p2_call.1}
  #allocation0 [shape = 'u32[]', space=smem, size = 0x4, offset = 0x4, fixed_abs, tag = 'smem constant byte address 0x4 - core index']
  #allocation1 [shape = 'u32[144,128]{1,0:T(1,128)}', space=vmem, size = 0x12000, scoped, tag = 'internal scratch']
  #allocation2 [shape = 'f32[4,128]{1,0:T(4,128)}', space=vmem, size = 0x800, scoped, tag = 'scratch operand']
  #allocation3 [shape = 'f32[1,512]{1,0:T(1,128)}', space=vmem, size = 0x800, scoped, tag = 'scratch operand']
  #allocation4 [shape = 'f32[1,128]{1,0:T(1,128)}', space=vmem, size = 0x200, scoped, tag = 'scratch operand']
  %s0 = inlined_call_operand.hbm [shape: f32[1,128], index: 0, kind: input, shape index: {}]
  %s1 = inlined_call_operand.hbm [shape: f32[4,128], index: 1, kind: input, shape index: {}]
  %s2 = inlined_call_operand.hbm [shape: f32[259,128], index: 2, kind: input, shape index: {}]
  %s3 = inlined_call_operand.hbm [shape: f32[514,512], index: 3, kind: input, shape index: {}]
  %s4 = inlined_call_operand.hbm [shape: f32[128,128], index: 4, kind: input, shape index: {}]
  %s5 = inlined_call_operand.hbm [shape: f32[1,128], index: 5, kind: output, shape index: {0}]
  %s6 = inlined_call_operand.hbm [shape: f32[4,128], index: 6, kind: output, shape index: {1}]
  %7 = xla_tuple %s5, %s6
  %s8 = sld [smem:[#allocation0]]
  $region66: #{_dtln_p2_call.1} parent=0
    _
  %s10 = ssub.s32 1, %s8
  %s11 = scalar_select 0, %s10, %s8
  $region1: #{_dtln_p2_call.1} parent=0
    #allocation5 [shape = 'u8[512]{0}', space=vmem, size = 0x400, scoped, tag = 'input window, operand 0, single buffered']
    #allocation6 [shape = 's32[1]{0}', space=sflag, size = 0x4, scoped, tag = 'scoped memory for _dtln_p2_call.1']
    #allocation7 [shape = 's32[1]{0}', space=sflag, size = 0x4, scoped, tag = 'scoped memory for _dtln_p2_call.1']
    #allocation8 [shape = 'u8[2048]{0}', space=vmem, size = 0x800, scoped, tag = 'input window, operand 1, single buffered']
    #allocation9 [shape = 's32[1]{0}', space=sflag, size = 0x4, scoped, tag = 'scoped memory for _dtln_p2_call.1']
    #allocation10 [shape = 'u8[135168]{0}', space=vmem, size = 0x21000, scoped, tag = 'input window, operand 2, single buffered']
    #allocation11 [shape = 'u8[1064960]{0}', space=vmem, size = 0x104000, scoped, tag = 'input window, operand 3, single buffered']
    #allocation12 [shape = 's32[1]{0}', space=sflag, size = 0x4, scoped, tag = 'scoped memory for _dtln_p2_call.1']
    #allocation13 [shape = 'u8[65536]{0}', space=vmem, size = 0x10000, scoped, tag = 'input window, operand 4, single buffered']
    #allocation14 [shape = 'u8[512]{0}', space=vmem, size = 0x400, scoped, tag = 'output window, operand 0, single buffered']
    #allocation15 [shape = 'u8[2048]{0}', space=vmem, size = 0x800, scoped, tag = 'output window, operand 1, single buffered']
    #allocation16 [shape = 's32[1]{0}', space=sflag, size = 0x4, scoped, tag = 'scoped memory for _dtln_p2_call.1']
    %12 = vsyncpa [#allocation6], 0
    %13 = vsyncpa [#allocation9], 0
    %14 = vsyncpa [#allocation12], 0
    %15 = vsyncpa [#allocation7], 0
    %16 = vsyncpa [#allocation16], 0
    // Predicated region
    $region2: #{_dtln_p2_call.1} parent=1 // pred_check
      _
    $region3: #{_dtln_p2_call.1} parent=1 // pred_check_branch
      %18 = sbr.rel (0) target = $region5
    $region4: #{_dtln_p2_call.1} parent=1 // pred_region
      %s20 = ssub.s32 16, 16
      %21 = vsyncadd [#allocation6], %s20
      %s23 = sshll.u32 [#allocation5], 4
      %s24 = int_to_ptr.vmem [resolvable:$true] %s23
      %26 = dma.hbm_to_vmem [thread:$0]  %s0, 16, %s24, [#allocation6]
    $region5: #{_dtln_p2_call.1} parent=1 // pred_fallthru
      _
    // Predicated region
    $region6: #{_dtln_p2_call.1} parent=1 // pred_check
      _
    $region7: #{_dtln_p2_call.1} parent=1 // pred_check_branch
      %28 = sbr.rel (0) target = $region9
    $region8: #{_dtln_p2_call.1} parent=1 // pred_region
      %s30 = ssub.s32 64, 64
      %31 = vsyncadd [#allocation9], %s30
      %s33 = sshll.u32 [#allocation8], 4
      %s34 = int_to_ptr.vmem [resolvable:$true] %s33
      %36 = dma.hbm_to_vmem [thread:$0]  %s1, 64, %s34, [#allocation9]
    $region9: #{_dtln_p2_call.1} parent=1 // pred_fallthru
      _
    // Predicated region
    $region10: #{_dtln_p2_call.1} parent=1 // pred_check
      _
    $region11: #{_dtln_p2_call.1} parent=1 // pred_check_branch
      %38 = sbr.rel (0) target = $region13
    $region12: #{_dtln_p2_call.1} parent=1 // pred_region
      %s40 = ssub.s32 4224, 4224
      %41 = vsyncadd [#allocation9], %s40
      %s42 = sshll.u32 [#allocation10], 4
      %s43 = int_to_ptr.vmem [resolvable:$true] %s42
      %48 = dma.hbm_to_vmem [thread:$0]  %s2, 4224, %s43, [#allocation9], 128, 128, 8
    $region13: #{_dtln_p2_call.1} parent=1 // pred_fallthru
      _
    // Predicated region
    $region14: #{_dtln_p2_call.1} parent=1 // pred_check
      _
    $region15: #{_dtln_p2_call.1} parent=1 // pred_check_branch
      %50 = sbr.rel (0) target = $region17
    $region16: #{_dtln_p2_call.1} parent=1 // pred_region
      %s52 = ssub.s32 33280, 33280
      %53 = vsyncadd [#allocation12], %s52
      %s54 = sshll.u32 [#allocation11], 4
      %s55 = int_to_ptr.vmem [resolvable:$true] %s54
      %60 = dma.hbm_to_vmem [thread:$0]  %s3, 33280, %s55, [#allocation12], 512, 512, 32
    $region17: #{_dtln_p2_call.1} parent=1 // pred_fallthru
      _
    // Predicated region
    $region18: #{_dtln_p2_call.1} parent=1 // pred_check
      _
    $region19: #{_dtln_p2_call.1} parent=1 // pred_check_branch
      %62 = sbr.rel (0) target = $region21
    $region20: #{_dtln_p2_call.1} parent=1 // pred_region
      %s64 = ssub.s32 2048, 2048
      %65 = vsyncadd [#allocation12], %s64
      %s66 = sshll.u32 [#allocation13], 4
      %s67 = int_to_ptr.vmem [resolvable:$true] %s66
      %72 = dma.hbm_to_vmem [thread:$0]  %s4, 2048, %s67, [#allocation12], 128, 128, 8
    $region21: #{_dtln_p2_call.1} parent=1 // pred_fallthru
      _
    // Predicated region
    $region22: #{_dtln_p2_call.1} parent=1 // pred_check
      _
    $region23: #{_dtln_p2_call.1} parent=1 // pred_check_branch
      %74 = sbr.rel (0) target = $region25
    $region24: #{_dtln_p2_call.1} parent=1 // pred_region
      %75 = dma.done [#allocation6], 16
    $region25: #{_dtln_p2_call.1} parent=1 // pred_fallthru
      _
    // Predicated region
    $region26: #{_dtln_p2_call.1} parent=1 // pred_check
      _
    $region27: #{_dtln_p2_call.1} parent=1 // pred_check_branch
      %77 = sbr.rel (0) target = $region29
    $region28: #{_dtln_p2_call.1} parent=1 // pred_region
      %78 = dma.done [#allocation9], 64
    $region29: #{_dtln_p2_call.1} parent=1 // pred_fallthru
      _
    // Predicated region
    $region30: #{_dtln_p2_call.1} parent=1 // pred_check
      _
    $region31: #{_dtln_p2_call.1} parent=1 // pred_check_branch
      %80 = sbr.rel (0) target = $region33
    $region32: #{_dtln_p2_call.1} parent=1 // pred_region
      %81 = dma.done [#allocation9], 4224
    $region33: #{_dtln_p2_call.1} parent=1 // pred_fallthru
      _
    // Predicated region
    $region34: #{_dtln_p2_call.1} parent=1 // pred_check
      _
    $region35: #{_dtln_p2_call.1} parent=1 // pred_check_branch
      %83 = sbr.rel (0) target = $region37
    $region36: #{_dtln_p2_call.1} parent=1 // pred_region
      %84 = dma.done [#allocation12], 33280
    $region37: #{_dtln_p2_call.1} parent=1 // pred_fallthru
      _
    // Predicated region
    $region38: #{_dtln_p2_call.1} parent=1 // pred_check
      _
    $region39: #{_dtln_p2_call.1} parent=1 // pred_check_branch
      %86 = sbr.rel (0) target = $region41
    $region40: #{_dtln_p2_call.1} parent=1 // pred_region
      %87 = dma.done [#allocation12], 2048
    $region41: #{_dtln_p2_call.1} parent=1 // pred_fallthru
      _
    %p88 = scmp.eq.s32.totalorder 0, 0
    // Predicated region
    $region42: #{_dtln_p2_call.1} parent=1 // pred_check
      %p89 = pneg %p88
    $region43: #{_dtln_p2_call.1} parent=1 // pred_check_branch
      %91 = sbr.rel (%p89) target = $region45
    $region44: #{_dtln_p2_call.1} parent=1 // pred_region
      %v92 = vld [vmem:[#allocation8] sm:$0xf]
      %93 = vst [vmem:[#allocation2] sm:$0xf] %v92
    $region45: #{_dtln_p2_call.1} parent=1 // pred_fallthru
      _
    %v94 = vld [vmem:[#allocation5] sm:$0x1]
    %v95 = vld [vmem:[#allocation10] sm:$0xff]
    %v96 = vld [vmem:[#allocation10 + $0x8] sm:$0xff]
    %v97 = vld [vmem:[#allocation10 + $0x10] sm:$0xff]
    %v98 = vld [vmem:[#allocation10 + $0x18] sm:$0xff]
    %v99 = vld [vmem:[#allocation10 + $0x20] sm:$0xff]
    %v100 = vld [vmem:[#allocation10 + $0x28] sm:$0xff]
    %v101 = vld [vmem:[#allocation10 + $0x30] sm:$0xff]
    %v102 = vld [vmem:[#allocation10 + $0x38] sm:$0xff]
    %v103 = vld [vmem:[#allocation10 + $0x40] sm:$0xff]
    %v104 = vld [vmem:[#allocation10 + $0x48] sm:$0xff]
    %v105 = vld [vmem:[#allocation10 + $0x50] sm:$0xff]
    %v106 = vld [vmem:[#allocation10 + $0x58] sm:$0xff]
    %v107 = vld [vmem:[#allocation10 + $0x60] sm:$0xff]
    %v108 = vld [vmem:[#allocation10 + $0x68] sm:$0xff]
    %v109 = vld [vmem:[#allocation10 + $0x70] sm:$0xff]
    %v110 = vld [vmem:[#allocation10 + $0x78] sm:$0xff]
    %111 = vmatprep.subr.mxu0 0.0
    %112 = vmatpush1.msra.mxu0 %v110
    %113 = vmatprep.subr.mxu0 0.0
    %114 = vmatpush1.msra.mxu0 %v109
    %115 = vmatprep.subr.mxu0 0.0
    %116 = vmatpush1.msra.mxu0 %v108
    %117 = vmatprep.subr.mxu0 0.0
    %118 = vmatpush1.msra.mxu0 %v107
    %119 = vmatprep.subr.mxu0 0.0
    %120 = vmatpush1.msra.mxu0 %v106
    %121 = vmatprep.subr.mxu0 0.0
    %122 = vmatpush1.msra.mxu0 %v105
    %123 = vmatprep.subr.mxu0 0.0
    %124 = vmatpush1.msra.mxu0 %v104
    %125 = vmatprep.subr.mxu0 0.0
    %126 = vmatpush1.msra.mxu0 %v103
    %127 = vmatprep.subr.mxu0 0.0
    %128 = vmatpush1.msra.mxu0 %v102
    %129 = vmatprep.subr.mxu0 0.0
    %130 = vmatpush1.msra.mxu0 %v101
    %131 = vmatprep.subr.mxu0 0.0
    %132 = vmatpush1.msra.mxu0 %v100
    %133 = vmatprep.subr.mxu0 0.0
    %134 = vmatpush1.msra.mxu0 %v99
    %135 = vmatprep.subr.mxu0 0.0
    %136 = vmatpush1.msra.mxu0 %v98
    %137 = vmatprep.subr.mxu0 0.0
    %138 = vmatpush1.msra.mxu0 %v97
    %139 = vmatprep.subr.mxu0 0.0
    %140 = vmatpush1.msra.mxu0 %v96
    %141 = vmatprep.subr.mxu0 0.0
    %142 = vmatpush1.msra.mxu0 %v95
    %143 = vmatprep.subr.mxu0 0.0
    %144 = vmatpush2.msra.mxu0 0.0
    %145 = vmatprep.subr.mxu0 0.0
    %146 = vmatpush2.msra.mxu0 0.0
    %147 = vmatprep.subr.mxu0 0.0
    %148 = vmatpush2.msra.mxu0 0.0
    %149 = vmatprep.subr.mxu0 0.0
    %150 = vmatpush2.msra.mxu0 0.0
    %151 = vmatprep.subr.mxu0 0.0
    %152 = vmatpush2.msra.mxu0 0.0
    %153 = vmatprep.subr.mxu0 0.0
    %154 = vmatpush2.msra.mxu0 0.0
    %155 = vmatprep.subr.mxu0 0.0
    %156 = vmatpush2.msra.mxu0 0.0
    %157 = vmatprep.subr.mxu0 0.0
    %158 = vmatpush2.msra.mxu0 0.0
    %159 = vmatprep.subr.mxu0 0.0
    %160 = vmatpush2.msra.mxu0 0.0
    %161 = vmatprep.subr.mxu0 0.0
    %162 = vmatpush2.msra.mxu0 0.0
    %163 = vmatprep.subr.mxu0 0.0
    %164 = vmatpush2.msra.mxu0 0.0
    %165 = vmatprep.subr.mxu0 0.0
    %166 = vmatpush2.msra.mxu0 0.0
    %167 = vmatprep.subr.mxu0 0.0
    %168 = vmatpush2.msra.mxu0 0.0
    %169 = vmatprep.subr.mxu0 0.0
    %170 = vmatpush2.msra.mxu0 0.0
    %171 = vmatprep.subr.mxu0 0.0
    %172 = vmatpush2.msra.mxu0 0.0
    %173 = vmatprep.subr.mxu0 0.0
    %174 = vmatpush2.msra.mxu0 0.0
    %175 = vmatprep.mubr.f32.mxu0 0.0
    %176 = vmatmul.mubr.f32.gmra.mxu0 %v94
    %v177 = vpop.f32.mrf.mxu0
    %v178 = vadd.f32 0.0, %v177
    %v179 = vpop.f32.mrf.mxu0
    %180 = vdwg.mxu0
    %vm181 = vcmask 1040384
    %v182 = vsel %vm181, %v178, 0.0
    %183 = vadd.xlane.f32.xlu0 %v182
    %v184 = vpop.xlane.xlu0 %183
    %v185 = vrcp.pop 128.0
    %v186 = vmul.f32 %v184, %v185
    %v187 = vsub.f32 %v178, %v186
    %v188 = vmul.f32 %v187, %v187
    %v189 = vsel %vm181, %v188, 0.0
    %190 = vadd.xlane.f32.xlu0 %v189
    %v191 = vpop.xlane.xlu0 %190
    %v192 = vmul.f32 %v191, %v185
    %v193 = vadd.f32 %v192, 1e-07
    %v194 = vrsqrt.pop %v193
    %v195 = vld [vmem:[#allocation10 + $0x100] sm:$0x1]
    %v196 = vld [vmem:[#allocation10 + $0x101] sm:$0x1]
    %v197 = vmul.f32 %v187, %v194
    %v198 = vmul.f32 %v197, %v195
    %v199 = vadd.f32 %v198, %v196
    %v200 = vld [vmem:[#allocation11] sm:$0xff]
    %v201 = vld [vmem:[#allocation11 + $0x8] sm:$0xff]
    %v202 = vld [vmem:[#allocation11 + $0x10] sm:$0xff]
    %v203 = vld [vmem:[#allocation11 + $0x18] sm:$0xff]
    %v204 = vld [vmem:[#allocation11 + $0x20] sm:$0xff]
    %v205 = vld [vmem:[#allocation11 + $0x28] sm:$0xff]
    %v206 = vld [vmem:[#allocation11 + $0x30] sm:$0xff]
    %v207 = vld [vmem:[#allocation11 + $0x38] sm:$0xff]
    %v208 = vld [vmem:[#allocation11 + $0x40] sm:$0xff]
    %v209 = vld [vmem:[#allocation11 + $0x48] sm:$0xff]
    %v210 = vld [vmem:[#allocation11 + $0x50] sm:$0xff]
    %v211 = vld [vmem:[#allocation11 + $0x58] sm:$0xff]
    %v212 = vld [vmem:[#allocation11 + $0x60] sm:$0xff]
    %v213 = vld [vmem:[#allocation11 + $0x68] sm:$0xff]
    %v214 = vld [vmem:[#allocation11 + $0x70] sm:$0xff]
    %v215 = vld [vmem:[#allocation11 + $0x78] sm:$0xff]
    %v216 = vld [vmem:[#allocation11 + $0x80] sm:$0xff]
    %v217 = vld [vmem:[#allocation11 + $0x88] sm:$0xff]
    %v218 = vld [vmem:[#allocation11 + $0x90] sm:$0xff]
    %v219 = vld [vmem:[#allocation11 + $0x98] sm:$0xff]
    %v220 = vld [vmem:[#allocation11 + $0xa0] sm:$0xff]
    %v221 = vld [vmem:[#allocation11 + $0xa8] sm:$0xff]
    %v222 = vld [vmem:[#allocation11 + $0xb0] sm:$0xff]
    %v223 = vld [vmem:[#allocation11 + $0xb8] sm:$0xff]
    %v224 = vld [vmem:[#allocation11 + $0xc0] sm:$0xff]
    %v225 = vld [vmem:[#allocation11 + $0xc8] sm:$0xff]
    %v226 = vld [vmem:[#allocation11 + $0xd0] sm:$0xff]
    %v227 = vld [vmem:[#allocation11 + $0xd8] sm:$0xff]
    %v228 = vld [vmem:[#allocation11 + $0xe0] sm:$0xff]
    %v229 = vld [vmem:[#allocation11 + $0xe8] sm:$0xff]
    %v230 = vld [vmem:[#allocation11 + $0xf0] sm:$0xff]
    %v231 = vld [vmem:[#allocation11 + $0xf8] sm:$0xff]
    %v232 = vld [vmem:[#allocation11 + $0x100] sm:$0xff]
    %v233 = vld [vmem:[#allocation11 + $0x108] sm:$0xff]
    %v234 = vld [vmem:[#allocation11 + $0x110] sm:$0xff]
    %v235 = vld [vmem:[#allocation11 + $0x118] sm:$0xff]
    %v236 = vld [vmem:[#allocation11 + $0x120] sm:$0xff]
    %v237 = vld [vmem:[#allocation11 + $0x128] sm:$0xff]
    %v238 = vld [vmem:[#allocation11 + $0x130] sm:$0xff]
    %v239 = vld [vmem:[#allocation11 + $0x138] sm:$0xff]
    %v240 = vld [vmem:[#allocation11 + $0x140] sm:$0xff]
    %v241 = vld [vmem:[#allocation11 + $0x148] sm:$0xff]
    %v242 = vld [vmem:[#allocation11 + $0x150] sm:$0xff]
    %v243 = vld [vmem:[#allocation11 + $0x158] sm:$0xff]
    %v244 = vld [vmem:[#allocation11 + $0x160] sm:$0xff]
    %v245 = vld [vmem:[#allocation11 + $0x168] sm:$0xff]
    %v246 = vld [vmem:[#allocation11 + $0x170] sm:$0xff]
    %v247 = vld [vmem:[#allocation11 + $0x178] sm:$0xff]
    %v248 = vld [vmem:[#allocation11 + $0x180] sm:$0xff]
    %v249 = vld [vmem:[#allocation11 + $0x188] sm:$0xff]
    %v250 = vld [vmem:[#allocation11 + $0x190] sm:$0xff]
    %v251 = vld [vmem:[#allocation11 + $0x198] sm:$0xff]
    %v252 = vld [vmem:[#allocation11 + $0x1a0] sm:$0xff]
    %v253 = vld [vmem:[#allocation11 + $0x1a8] sm:$0xff]
    %v254 = vld [vmem:[#allocation11 + $0x1b0] sm:$0xff]
    %v255 = vld [vmem:[#allocation11 + $0x1b8] sm:$0xff]
    %v256 = vld [vmem:[#allocation11 + $0x1c0] sm:$0xff]
    %v257 = vld [vmem:[#allocation11 + $0x1c8] sm:$0xff]
    %v258 = vld [vmem:[#allocation11 + $0x1d0] sm:$0xff]
    %v259 = vld [vmem:[#allocation11 + $0x1d8] sm:$0xff]
    %v260 = vld [vmem:[#allocation11 + $0x1e0] sm:$0xff]
    %v261 = vld [vmem:[#allocation11 + $0x1e8] sm:$0xff]
    %v262 = vld [vmem:[#allocation11 + $0x1f0] sm:$0xff]
    %v263 = vld [vmem:[#allocation11 + $0x1f8] sm:$0xff]
    %v264 = vld [vmem:[#allocation11 + $0x200] sm:$0xff]
    %v265 = vld [vmem:[#allocation11 + $0x208] sm:$0xff]
    %v266 = vld [vmem:[#allocation11 + $0x210] sm:$0xff]
    %v267 = vld [vmem:[#allocation11 + $0x218] sm:$0xff]
    %v268 = vld [vmem:[#allocation11 + $0x220] sm:$0xff]
    %v269 = vld [vmem:[#allocation11 + $0x228] sm:$0xff]
    %v270 = vld [vmem:[#allocation11 + $0x230] sm:$0xff]
    %v271 = vld [vmem:[#allocation11 + $0x238] sm:$0xff]
    %v272 = vld [vmem:[#allocation11 + $0x240] sm:$0xff]
    %v273 = vld [vmem:[#allocation11 + $0x248] sm:$0xff]
    %v274 = vld [vmem:[#allocation11 + $0x250] sm:$0xff]
    %v275 = vld [vmem:[#allocation11 + $0x258] sm:$0xff]
    %v276 = vld [vmem:[#allocation11 + $0x260] sm:$0xff]
    %v277 = vld [vmem:[#allocation11 + $0x268] sm:$0xff]
    %v278 = vld [vmem:[#allocation11 + $0x270] sm:$0xff]
    %v279 = vld [vmem:[#allocation11 + $0x278] sm:$0xff]
    %v280 = vld [vmem:[#allocation11 + $0x280] sm:$0xff]
    %v281 = vld [vmem:[#allocation11 + $0x288] sm:$0xff]
    %v282 = vld [vmem:[#allocation11 + $0x290] sm:$0xff]
    %v283 = vld [vmem:[#allocation11 + $0x298] sm:$0xff]
    %v284 = vld [vmem:[#allocation11 + $0x2a0] sm:$0xff]
    %v285 = vld [vmem:[#allocation11 + $0x2a8] sm:$0xff]
    %v286 = vld [vmem:[#allocation11 + $0x2b0] sm:$0xff]
    %v287 = vld [vmem:[#allocation11 + $0x2b8] sm:$0xff]
    %v288 = vld [vmem:[#allocation11 + $0x2c0] sm:$0xff]
    %v289 = vld [vmem:[#allocation11 + $0x2c8] sm:$0xff]
    %v290 = vld [vmem:[#allocation11 + $0x2d0] sm:$0xff]
    %v291 = vld [vmem:[#allocation11 + $0x2d8] sm:$0xff]
    %v292 = vld [vmem:[#allocation11 + $0x2e0] sm:$0xff]
    %v293 = vld [vmem:[#allocation11 + $0x2e8] sm:$0xff]
    %v294 = vld [vmem:[#allocation11 + $0x2f0] sm:$0xff]
    %v295 = vld [vmem:[#allocation11 + $0x2f8] sm:$0xff]
    %v296 = vld [vmem:[#allocation11 + $0x300] sm:$0xff]
    %v297 = vld [vmem:[#allocation11 + $0x308] sm:$0xff]
    %v298 = vld [vmem:[#allocation11 + $0x310] sm:$0xff]
    %v299 = vld [vmem:[#allocation11 + $0x318] sm:$0xff]
    %v300 = vld [vmem:[#allocation11 + $0x320] sm:$0xff]
    %v301 = vld [vmem:[#allocation11 + $0x328] sm:$0xff]
    %v302 = vld [vmem:[#allocation11 + $0x330] sm:$0xff]
    %v303 = vld [vmem:[#allocation11 + $0x338] sm:$0xff]
    %v304 = vld [vmem:[#allocation11 + $0x340] sm:$0xff]
    %v305 = vld [vmem:[#allocation11 + $0x348] sm:$0xff]
    %v306 = vld [vmem:[#allocation11 + $0x350] sm:$0xff]
    %v307 = vld [vmem:[#allocation11 + $0x358] sm:$0xff]
    %v308 = vld [vmem:[#allocation11 + $0x360] sm:$0xff]
    %v309 = vld [vmem:[#allocation11 + $0x368] sm:$0xff]
    %v310 = vld [vmem:[#allocation11 + $0x370] sm:$0xff]
    %v311 = vld [vmem:[#allocation11 + $0x378] sm:$0xff]
    %v312 = vld [vmem:[#allocation11 + $0x380] sm:$0xff]
    %v313 = vld [vmem:[#allocation11 + $0x388] sm:$0xff]
    %v314 = vld [vmem:[#allocation11 + $0x390] sm:$0xff]
    %v315 = vld [vmem:[#allocation11 + $0x398] sm:$0xff]
    %v316 = vld [vmem:[#allocation11 + $0x3a0] sm:$0xff]
    %v317 = vld [vmem:[#allocation11 + $0x3a8] sm:$0xff]
    %v318 = vld [vmem:[#allocation11 + $0x3b0] sm:$0xff]
    %v319 = vld [vmem:[#allocation11 + $0x3b8] sm:$0xff]
    %v320 = vld [vmem:[#allocation11 + $0x3c0] sm:$0xff]
    %v321 = vld [vmem:[#allocation11 + $0x3c8] sm:$0xff]
    %v322 = vld [vmem:[#allocation11 + $0x3d0] sm:$0xff]
    %v323 = vld [vmem:[#allocation11 + $0x3d8] sm:$0xff]
    %v324 = vld [vmem:[#allocation11 + $0x3e0] sm:$0xff]
    %v325 = vld [vmem:[#allocation11 + $0x3e8] sm:$0xff]
    %v326 = vld [vmem:[#allocation11 + $0x3f0] sm:$0xff]
    %v327 = vld [vmem:[#allocation11 + $0x3f8] sm:$0xff]
    %v328 = vld [vmem:[#allocation11 + $0x400] sm:$0xff]
    %v329 = vld [vmem:[#allocation11 + $0x408] sm:$0xff]
    %v330 = vld [vmem:[#allocation11 + $0x410] sm:$0xff]
    %v331 = vld [vmem:[#allocation11 + $0x418] sm:$0xff]
    %v332 = vld [vmem:[#allocation11 + $0x420] sm:$0xff]
    %v333 = vld [vmem:[#allocation11 + $0x428] sm:$0xff]
    %v334 = vld [vmem:[#allocation11 + $0x430] sm:$0xff]
    %v335 = vld [vmem:[#allocation11 + $0x438] sm:$0xff]
    %v336 = vld [vmem:[#allocation11 + $0x440] sm:$0xff]
    %v337 = vld [vmem:[#allocation11 + $0x448] sm:$0xff]
    %v338 = vld [vmem:[#allocation11 + $0x450] sm:$0xff]
    %v339 = vld [vmem:[#allocation11 + $0x458] sm:$0xff]
    %v340 = vld [vmem:[#allocation11 + $0x460] sm:$0xff]
    %v341 = vld [vmem:[#allocation11 + $0x468] sm:$0xff]
    %v342 = vld [vmem:[#allocation11 + $0x470] sm:$0xff]
    %v343 = vld [vmem:[#allocation11 + $0x478] sm:$0xff]
    %v344 = vld [vmem:[#allocation11 + $0x480] sm:$0xff]
    %v345 = vld [vmem:[#allocation11 + $0x488] sm:$0xff]
    %v346 = vld [vmem:[#allocation11 + $0x490] sm:$0xff]
    %v347 = vld [vmem:[#allocation11 + $0x498] sm:$0xff]
    %v348 = vld [vmem:[#allocation11 + $0x4a0] sm:$0xff]
    %v349 = vld [vmem:[#allocation11 + $0x4a8] sm:$0xff]
    %v350 = vld [vmem:[#allocation11 + $0x4b0] sm:$0xff]
    %v351 = vld [vmem:[#allocation11 + $0x4b8] sm:$0xff]
    %v352 = vld [vmem:[#allocation11 + $0x4c0] sm:$0xff]
    %v353 = vld [vmem:[#allocation11 + $0x4c8] sm:$0xff]
    %v354 = vld [vmem:[#allocation11 + $0x4d0] sm:$0xff]
    %v355 = vld [vmem:[#allocation11 + $0x4d8] sm:$0xff]
    %v356 = vld [vmem:[#allocation11 + $0x4e0] sm:$0xff]
    %v357 = vld [vmem:[#allocation11 + $0x4e8] sm:$0xff]
    %v358 = vld [vmem:[#allocation11 + $0x4f0] sm:$0xff]
    %v359 = vld [vmem:[#allocation11 + $0x4f8] sm:$0xff]
    %v360 = vld [vmem:[#allocation11 + $0x500] sm:$0xff]
    %v361 = vld [vmem:[#allocation11 + $0x508] sm:$0xff]
    %v362 = vld [vmem:[#allocation11 + $0x510] sm:$0xff]
    %v363 = vld [vmem:[#allocation11 + $0x518] sm:$0xff]
    %v364 = vld [vmem:[#allocation11 + $0x520] sm:$0xff]
    %v365 = vld [vmem:[#allocation11 + $0x528] sm:$0xff]
    %v366 = vld [vmem:[#allocation11 + $0x530] sm:$0xff]
    %v367 = vld [vmem:[#allocation11 + $0x538] sm:$0xff]
    %v368 = vld [vmem:[#allocation11 + $0x540] sm:$0xff]
    %v369 = vld [vmem:[#allocation11 + $0x548] sm:$0xff]
    %v370 = vld [vmem:[#allocation11 + $0x550] sm:$0xff]
    %v371 = vld [vmem:[#allocation11 + $0x558] sm:$0xff]
    %v372 = vld [vmem:[#allocation11 + $0x560] sm:$0xff]
    %v373 = vld [vmem:[#allocation11 + $0x568] sm:$0xff]
    %v374 = vld [vmem:[#allocation11 + $0x570] sm:$0xff]
    %v375 = vld [vmem:[#allocation11 + $0x578] sm:$0xff]
    %v376 = vld [vmem:[#allocation11 + $0x580] sm:$0xff]
    %v377 = vld [vmem:[#allocation11 + $0x588] sm:$0xff]
    %v378 = vld [vmem:[#allocation11 + $0x590] sm:$0xff]
    %v379 = vld [vmem:[#allocation11 + $0x598] sm:$0xff]
    %v380 = vld [vmem:[#allocation11 + $0x5a0] sm:$0xff]
    %v381 = vld [vmem:[#allocation11 + $0x5a8] sm:$0xff]
    %v382 = vld [vmem:[#allocation11 + $0x5b0] sm:$0xff]
    %v383 = vld [vmem:[#allocation11 + $0x5b8] sm:$0xff]
    %v384 = vld [vmem:[#allocation11 + $0x5c0] sm:$0xff]
    %v385 = vld [vmem:[#allocation11 + $0x5c8] sm:$0xff]
    %v386 = vld [vmem:[#allocation11 + $0x5d0] sm:$0xff]
    %v387 = vld [vmem:[#allocation11 + $0x5d8] sm:$0xff]
    %v388 = vld [vmem:[#allocation11 + $0x5e0] sm:$0xff]
    %v389 = vld [vmem:[#allocation11 + $0x5e8] sm:$0xff]
    %v390 = vld [vmem:[#allocation11 + $0x5f0] sm:$0xff]
    %v391 = vld [vmem:[#allocation11 + $0x5f8] sm:$0xff]
    %v392 = vld [vmem:[#allocation11 + $0x600] sm:$0xff]
    %v393 = vld [vmem:[#allocation11 + $0x608] sm:$0xff]
    %v394 = vld [vmem:[#allocation11 + $0x610] sm:$0xff]
    %v395 = vld [vmem:[#allocation11 + $0x618] sm:$0xff]
    %v396 = vld [vmem:[#allocation11 + $0x620] sm:$0xff]
    %v397 = vld [vmem:[#allocation11 + $0x628] sm:$0xff]
    %v398 = vld [vmem:[#allocation11 + $0x630] sm:$0xff]
    %v399 = vld [vmem:[#allocation11 + $0x638] sm:$0xff]
    %v400 = vld [vmem:[#allocation11 + $0x640] sm:$0xff]
    %v401 = vld [vmem:[#allocation11 + $0x648] sm:$0xff]
    %v402 = vld [vmem:[#allocation11 + $0x650] sm:$0xff]
    %v403 = vld [vmem:[#allocation11 + $0x658] sm:$0xff]
    %v404 = vld [vmem:[#allocation11 + $0x660] sm:$0xff]
    %v405 = vld [vmem:[#allocation11 + $0x668] sm:$0xff]
    %v406 = vld [vmem:[#allocation11 + $0x670] sm:$0xff]
    %v407 = vld [vmem:[#allocation11 + $0x678] sm:$0xff]
    %v408 = vld [vmem:[#allocation11 + $0x680] sm:$0xff]
    %v409 = vld [vmem:[#allocation11 + $0x688] sm:$0xff]
    %v410 = vld [vmem:[#allocation11 + $0x690] sm:$0xff]
    %v411 = vld [vmem:[#allocation11 + $0x698] sm:$0xff]
    %v412 = vld [vmem:[#allocation11 + $0x6a0] sm:$0xff]
    %v413 = vld [vmem:[#allocation11 + $0x6a8] sm:$0xff]
    %v414 = vld [vmem:[#allocation11 + $0x6b0] sm:$0xff]
    %v415 = vld [vmem:[#allocation11 + $0x6b8] sm:$0xff]
    %v416 = vld [vmem:[#allocation11 + $0x6c0] sm:$0xff]
    %v417 = vld [vmem:[#allocation11 + $0x6c8] sm:$0xff]
    %v418 = vld [vmem:[#allocation11 + $0x6d0] sm:$0xff]
    %v419 = vld [vmem:[#allocation11 + $0x6d8] sm:$0xff]
    %v420 = vld [vmem:[#allocation11 + $0x6e0] sm:$0xff]
    %v421 = vld [vmem:[#allocation11 + $0x6e8] sm:$0xff]
    %v422 = vld [vmem:[#allocation11 + $0x6f0] sm:$0xff]
    %v423 = vld [vmem:[#allocation11 + $0x6f8] sm:$0xff]
    %v424 = vld [vmem:[#allocation11 + $0x700] sm:$0xff]
    %v425 = vld [vmem:[#allocation11 + $0x708] sm:$0xff]
    %v426 = vld [vmem:[#allocation11 + $0x710] sm:$0xff]
    %v427 = vld [vmem:[#allocation11 + $0x718] sm:$0xff]
    %v428 = vld [vmem:[#allocation11 + $0x720] sm:$0xff]
    %v429 = vld [vmem:[#allocation11 + $0x728] sm:$0xff]
    %v430 = vld [vmem:[#allocation11 + $0x730] sm:$0xff]
    %v431 = vld [vmem:[#allocation11 + $0x738] sm:$0xff]
    %v432 = vld [vmem:[#allocation11 + $0x740] sm:$0xff]
    %v433 = vld [vmem:[#allocation11 + $0x748] sm:$0xff]
    %v434 = vld [vmem:[#allocation11 + $0x750] sm:$0xff]
    %v435 = vld [vmem:[#allocation11 + $0x758] sm:$0xff]
    %v436 = vld [vmem:[#allocation11 + $0x760] sm:$0xff]
    %v437 = vld [vmem:[#allocation11 + $0x768] sm:$0xff]
    %v438 = vld [vmem:[#allocation11 + $0x770] sm:$0xff]
    %v439 = vld [vmem:[#allocation11 + $0x778] sm:$0xff]
    %v440 = vld [vmem:[#allocation11 + $0x780] sm:$0xff]
    %v441 = vld [vmem:[#allocation11 + $0x788] sm:$0xff]
    %v442 = vld [vmem:[#allocation11 + $0x790] sm:$0xff]
    %v443 = vld [vmem:[#allocation11 + $0x798] sm:$0xff]
    %v444 = vld [vmem:[#allocation11 + $0x7a0] sm:$0xff]
    %v445 = vld [vmem:[#allocation11 + $0x7a8] sm:$0xff]
    %v446 = vld [vmem:[#allocation11 + $0x7b0] sm:$0xff]
    %v447 = vld [vmem:[#allocation11 + $0x7b8] sm:$0xff]
    %v448 = vld [vmem:[#allocation11 + $0x7c0] sm:$0xff]
    %v449 = vld [vmem:[#allocation11 + $0x7c8] sm:$0xff]
    %v450 = vld [vmem:[#allocation11 + $0x7d0] sm:$0xff]
    %v451 = vld [vmem:[#allocation11 + $0x7d8] sm:$0xff]
    %v452 = vld [vmem:[#allocation11 + $0x7e0] sm:$0xff]
    %v453 = vld [vmem:[#allocation11 + $0x7e8] sm:$0xff]
    %v454 = vld [vmem:[#allocation11 + $0x7f0] sm:$0xff]
    %v455 = vld [vmem:[#allocation11 + $0x7f8] sm:$0xff]
    %s456 = scalar_lea.vmem [#allocation11], 2048
    %v457 = vld [vmem:[%s456] ss:$8 sm:$0xf]
    %s458 = scalar_lea.vmem [#allocation11], 2049
    %v459 = vld [vmem:[%s458] ss:$8 sm:$0xf]
    %v461 = vlaneseq
    %v462 = vshrl.u32 %v461, 7
    %v463 = vsub.s32 0, %v462
    %v464 = vrot.slane %v457, %v463
    %v465 = vlaneseq
    %v466 = vshrl.u32 %v465, 7
    %v467 = vsub.s32 1, %v466
    %v468 = vrot.slane %v457, %v467
    %v469 = vlaneseq
    %v470 = vshrl.u32 %v469, 7
    %v471 = vsub.s32 2, %v470
    %v472 = vrot.slane %v457, %v471
    %v473 = vlaneseq
    %v474 = vshrl.u32 %v473, 7
    %v475 = vsub.s32 3, %v474
    %v476 = vrot.slane %v457, %v475
    %481 = vmatprep.subr.mxu0 %v261
    %482 = vmatpush1.msra.mxu0 %v260
    %483 = vmatprep.subr.mxu0 %v257
    %484 = vmatpush1.msra.mxu0 %v256
    %485 = vmatprep.subr.mxu0 %v253
    %486 = vmatpush1.msra.mxu0 %v252
    %487 = vmatprep.subr.mxu0 %v249
    %488 = vmatpush1.msra.mxu0 %v248
    %489 = vmatprep.subr.mxu0 %v245
    %490 = vmatpush1.msra.mxu0 %v244
    %491 = vmatprep.subr.mxu0 %v241
    %492 = vmatpush1.msra.mxu0 %v240
    %493 = vmatprep.subr.mxu0 %v237
    %494 = vmatpush1.msra.mxu0 %v236
    %495 = vmatprep.subr.mxu0 %v233
    %496 = vmatpush1.msra.mxu0 %v232
    %497 = vmatprep.subr.mxu0 %v229
    %498 = vmatpush1.msra.mxu0 %v228
    %499 = vmatprep.subr.mxu0 %v225
    %500 = vmatpush1.msra.mxu0 %v224
    %501 = vmatprep.subr.mxu0 %v221
    %502 = vmatpush1.msra.mxu0 %v220
    %503 = vmatprep.subr.mxu0 %v217
    %504 = vmatpush1.msra.mxu0 %v216
    %505 = vmatprep.subr.mxu0 %v213
    %506 = vmatpush1.msra.mxu0 %v212
    %507 = vmatprep.subr.mxu0 %v209
    %508 = vmatpush1.msra.mxu0 %v208
    %509 = vmatprep.subr.mxu0 %v205
    %510 = vmatpush1.msra.mxu0 %v204
    %511 = vmatprep.subr.mxu0 %v201
    %512 = vmatpush1.msra.mxu0 %v200
    %513 = vmatprep.subr.mxu0 0.0
    %514 = vmatpush2.msra.mxu0 0.0
    %515 = vmatprep.subr.mxu0 0.0
    %516 = vmatpush2.msra.mxu0 0.0
    %517 = vmatprep.subr.mxu0 0.0
    %518 = vmatpush2.msra.mxu0 0.0
    %519 = vmatprep.subr.mxu0 0.0
    %520 = vmatpush2.msra.mxu0 0.0
    %521 = vmatprep.subr.mxu0 0.0
    %522 = vmatpush2.msra.mxu0 0.0
    %523 = vmatprep.subr.mxu0 0.0
    %524 = vmatpush2.msra.mxu0 0.0
    %525 = vmatprep.subr.mxu0 0.0
    %526 = vmatpush2.msra.mxu0 0.0
    %527 = vmatprep.subr.mxu0 0.0
    %528 = vmatpush2.msra.mxu0 0.0
    %529 = vmatprep.subr.mxu0 0.0
    %530 = vmatpush2.msra.mxu0 0.0
    %531 = vmatprep.subr.mxu0 0.0
    %532 = vmatpush2.msra.mxu0 0.0
    %533 = vmatprep.subr.mxu0 0.0
    %534 = vmatpush2.msra.mxu0 0.0
    %535 = vmatprep.subr.mxu0 0.0
    %536 = vmatpush2.msra.mxu0 0.0
    %537 = vmatprep.subr.mxu0 0.0
    %538 = vmatpush2.msra.mxu0 0.0
    %539 = vmatprep.subr.mxu0 0.0
    %540 = vmatpush2.msra.mxu0 0.0
    %541 = vmatprep.subr.mxu0 0.0
    %542 = vmatpush2.msra.mxu0 0.0
    %543 = vmatprep.subr.mxu0 0.0
    %544 = vmatpush2.msra.mxu0 0.0
    %545 = vmatprep.mubr.f32.mxu0 0.0
    %546 = vmatmul.mubr.f32.gmra.mxu0 %v199
    %v547 = vpop.f32.mrf.mxu0
    %v548 = vadd.f32 %v464, %v547
    %v549 = vpop.f32.mrf.mxu0
    %v550 = vadd.f32 %v468, %v549
    %551 = vdwg.mxu0
    %552 = vmatprep.subr.mxu0 %v263
    %553 = vmatpush1.msra.mxu0 %v262
    %554 = vmatprep.subr.mxu0 %v259
    %555 = vmatpush1.msra.mxu0 %v258
    %556 = vmatprep.subr.mxu0 %v255
    %557 = vmatpush1.msra.mxu0 %v254
    %558 = vmatprep.subr.mxu0 %v251
    %559 = vmatpush1.msra.mxu0 %v250
    %560 = vmatprep.subr.mxu0 %v247
    %561 = vmatpush1.msra.mxu0 %v246
    %562 = vmatprep.subr.mxu0 %v243
    %563 = vmatpush1.msra.mxu0 %v242
    %564 = vmatprep.subr.mxu0 %v239
    %565 = vmatpush1.msra.mxu0 %v238
    %566 = vmatprep.subr.mxu0 %v235
    %567 = vmatpush1.msra.mxu0 %v234
    %568 = vmatprep.subr.mxu0 %v231
    %569 = vmatpush1.msra.mxu0 %v230
    %570 = vmatprep.subr.mxu0 %v227
    %571 = vmatpush1.msra.mxu0 %v226
    %572 = vmatprep.subr.mxu0 %v223
    %573 = vmatpush1.msra.mxu0 %v222
    %574 = vmatprep.subr.mxu0 %v219
    %575 = vmatpush1.msra.mxu0 %v218
    %576 = vmatprep.subr.mxu0 %v215
    %577 = vmatpush1.msra.mxu0 %v214
    %578 = vmatprep.subr.mxu0 %v211
    %579 = vmatpush1.msra.mxu0 %v210
    %580 = vmatprep.subr.mxu0 %v207
    %581 = vmatpush1.msra.mxu0 %v206
    %582 = vmatprep.subr.mxu0 %v203
    %583 = vmatpush1.msra.mxu0 %v202
    %584 = vmatprep.subr.mxu0 0.0
    %585 = vmatpush2.msra.mxu0 0.0
    %586 = vmatprep.subr.mxu0 0.0
    %587 = vmatpush2.msra.mxu0 0.0
    %588 = vmatprep.subr.mxu0 0.0
    %589 = vmatpush2.msra.mxu0 0.0
    %590 = vmatprep.subr.mxu0 0.0
    %591 = vmatpush2.msra.mxu0 0.0
    %592 = vmatprep.subr.mxu0 0.0
    %593 = vmatpush2.msra.mxu0 0.0
    %594 = vmatprep.subr.mxu0 0.0
    %595 = vmatpush2.msra.mxu0 0.0
    %596 = vmatprep.subr.mxu0 0.0
    %597 = vmatpush2.msra.mxu0 0.0
    %598 = vmatprep.subr.mxu0 0.0
    %599 = vmatpush2.msra.mxu0 0.0
    %600 = vmatprep.subr.mxu0 0.0
    %601 = vmatpush2.msra.mxu0 0.0
    %602 = vmatprep.subr.mxu0 0.0
    %603 = vmatpush2.msra.mxu0 0.0
    %604 = vmatprep.subr.mxu0 0.0
    %605 = vmatpush2.msra.mxu0 0.0
    %606 = vmatprep.subr.mxu0 0.0
    %607 = vmatpush2.msra.mxu0 0.0
    %608 = vmatprep.subr.mxu0 0.0
    %609 = vmatpush2.msra.mxu0 0.0
    %610 = vmatprep.subr.mxu0 0.0
    %611 = vmatpush2.msra.mxu0 0.0
    %612 = vmatprep.subr.mxu0 0.0
    %613 = vmatpush2.msra.mxu0 0.0
    %614 = vmatprep.subr.mxu0 0.0
    %615 = vmatpush2.msra.mxu0 0.0
    %616 = vmatprep.mubr.f32.mxu0 0.0
    %617 = vmatmul.mubr.f32.gmra.mxu0 %v199
    %v618 = vpop.f32.mrf.mxu0
    %v619 = vadd.f32 %v472, %v618
    %v620 = vpop.f32.mrf.mxu0
    %v621 = vadd.f32 %v476, %v620
    %622 = vdwg.mxu0
    %v627 = vcombine.low %v548, %v550
    %v628 = vcombine.low %v619, %v621
    %v630 = vunpack.c.l.s4 1966171168
    %v631 = vunpack.c.0.s8 %v630
    %v632 = vlaneseq
    %v633 = vshrl.u32 %v632, 7
    %v634 = vsub.s32 %v631, %v633
    %v635 = vrot.slane %v627, %v634
    %v637 = vunpack.c.l.s4 1966171168
    %v638 = vunpack.c.0.s8 %v637
    %v639 = vlaneseq
    %v640 = vshrl.u32 %v639, 7
    %v641 = vsub.s32 %v638, %v640
    %v642 = vrot.slane %v628, %v641
    %v643 = vcombine.low %v635, %v642
    %v645 = vunpack.c.l.s4 1966171168
    %v646 = vunpack.c.0.s8 %v645
    %v647 = vlaneseq
    %v648 = vshrl.u32 %v647, 7
    %v649 = vsub.s32 %v646, %v648
    %v650 = vrot.slane %v643, %v649
    %v652 = vlaneseq
    %vm653 = vcmp.ge.s32.totalorder %v652, 0
    %vm654 = vcmp.lt.s32.totalorder %v652, 512
    %vm655 = vmand %vm653, %vm654
    %656 = vst.msk [vmem:[#allocation3] sm:$0xf] %vm655, %v650
    %v657 = vld [vmem:[#allocation2] sm:$0x1]
    %v658 = vld [vmem:[#allocation2 + $0x1] sm:$0x1]
    %v659 = vld [vmem:[#allocation2 + $0x2] sm:$0x1]
    %v660 = vld [vmem:[#allocation2 + $0x3] sm:$0x1]
    %p661 = scmp.lt.s32.totalorder 0, 1
    %v662 = vld [vmem:[#allocation3] sm:$0xf]
    %663 = vmatprep.subr.mxu0 %v325
    %664 = vmatpush1.msra.mxu0 %v324
    %665 = vmatprep.subr.mxu0 %v321
    %666 = vmatpush1.msra.mxu0 %v320
    %667 = vmatprep.subr.mxu0 %v317
    %668 = vmatpush1.msra.mxu0 %v316
    %669 = vmatprep.subr.mxu0 %v313
    %670 = vmatpush1.msra.mxu0 %v312
    %671 = vmatprep.subr.mxu0 %v309
    %672 = vmatpush1.msra.mxu0 %v308
    %673 = vmatprep.subr.mxu0 %v305
    %674 = vmatpush1.msra.mxu0 %v304
    %675 = vmatprep.subr.mxu0 %v301
    %676 = vmatpush1.msra.mxu0 %v300
    %677 = vmatprep.subr.mxu0 %v297
    %678 = vmatpush1.msra.mxu0 %v296
    %679 = vmatprep.subr.mxu0 %v293
    %680 = vmatpush1.msra.mxu0 %v292
    %681 = vmatprep.subr.mxu0 %v289
    %682 = vmatpush1.msra.mxu0 %v288
    %683 = vmatprep.subr.mxu0 %v285
    %684 = vmatpush1.msra.mxu0 %v284
    %685 = vmatprep.subr.mxu0 %v281
    %686 = vmatpush1.msra.mxu0 %v280
    %687 = vmatprep.subr.mxu0 %v277
    %688 = vmatpush1.msra.mxu0 %v276
    %689 = vmatprep.subr.mxu0 %v273
    %690 = vmatpush1.msra.mxu0 %v272
    %691 = vmatprep.subr.mxu0 %v269
    %692 = vmatpush1.msra.mxu0 %v268
    %693 = vmatprep.subr.mxu0 %v265
    %694 = vmatpush1.msra.mxu0 %v264
    %695 = vmatprep.subr.mxu0 0.0
    %696 = vmatpush2.msra.mxu0 0.0
    %697 = vmatprep.subr.mxu0 0.0
    %698 = vmatpush2.msra.mxu0 0.0
    %699 = vmatprep.subr.mxu0 0.0
    %700 = vmatpush2.msra.mxu0 0.0
    %701 = vmatprep.subr.mxu0 0.0
    %702 = vmatpush2.msra.mxu0 0.0
    %703 = vmatprep.subr.mxu0 0.0
    %704 = vmatpush2.msra.mxu0 0.0
    %705 = vmatprep.subr.mxu0 0.0
    %706 = vmatpush2.msra.mxu0 0.0
    %707 = vmatprep.subr.mxu0 0.0
    %708 = vmatpush2.msra.mxu0 0.0
    %709 = vmatprep.subr.mxu0 0.0
    %710 = vmatpush2.msra.mxu0 0.0
    %711 = vmatprep.subr.mxu0 0.0
    %712 = vmatpush2.msra.mxu0 0.0
    %713 = vmatprep.subr.mxu0 0.0
    %714 = vmatpush2.msra.mxu0 0.0
    %715 = vmatprep.subr.mxu0 0.0
    %716 = vmatpush2.msra.mxu0 0.0
    %717 = vmatprep.subr.mxu0 0.0
    %718 = vmatpush2.msra.mxu0 0.0
    %719 = vmatprep.subr.mxu0 0.0
    %720 = vmatpush2.msra.mxu0 0.0
    %721 = vmatprep.subr.mxu0 0.0
    %722 = vmatpush2.msra.mxu0 0.0
    %723 = vmatprep.subr.mxu0 0.0
    %724 = vmatpush2.msra.mxu0 0.0
    %725 = vmatprep.subr.mxu0 0.0
    %726 = vmatpush2.msra.mxu0 0.0
    %727 = vmatprep.mubr.f32.mxu0 0.0
    %728 = vmatmul.mubr.f32.gmra.mxu0 %v657
    %v729 = vpop.f32.mrf.mxu0
    %v730 = vadd.f32 0.0, %v729
    %v731 = vpop.f32.mrf.mxu0
    %v732 = vadd.f32 0.0, %v731
    %733 = vdwg.mxu0
    %734 = vmatprep.subr.mxu0 %v327
    %735 = vmatpush1.msra.mxu0 %v326
    %736 = vmatprep.subr.mxu0 %v323
    %737 = vmatpush1.msra.mxu0 %v322
    %738 = vmatprep.subr.mxu0 %v319
    %739 = vmatpush1.msra.mxu0 %v318
    %740 = vmatprep.subr.mxu0 %v315
    %741 = vmatpush1.msra.mxu0 %v314
    %742 = vmatprep.subr.mxu0 %v311
    %743 = vmatpush1.msra.mxu0 %v310
    %744 = vmatprep.subr.mxu0 %v307
    %745 = vmatpush1.msra.mxu0 %v306
    %746 = vmatprep.subr.mxu0 %v303
    %747 = vmatpush1.msra.mxu0 %v302
    %748 = vmatprep.subr.mxu0 %v299
    %749 = vmatpush1.msra.mxu0 %v298
    %750 = vmatprep.subr.mxu0 %v295
    %751 = vmatpush1.msra.mxu0 %v294
    %752 = vmatprep.subr.mxu0 %v291
    %753 = vmatpush1.msra.mxu0 %v290
    %754 = vmatprep.subr.mxu0 %v287
    %755 = vmatpush1.msra.mxu0 %v286
    %756 = vmatprep.subr.mxu0 %v283
    %757 = vmatpush1.msra.mxu0 %v282
    %758 = vmatprep.subr.mxu0 %v279
    %759 = vmatpush1.msra.mxu0 %v278
    %760 = vmatprep.subr.mxu0 %v275
    %761 = vmatpush1.msra.mxu0 %v274
    %762 = vmatprep.subr.mxu0 %v271
    %763 = vmatpush1.msra.mxu0 %v270
    %764 = vmatprep.subr.mxu0 %v267
    %765 = vmatpush1.msra.mxu0 %v266
    %766 = vmatprep.subr.mxu0 0.0
    %767 = vmatpush2.msra.mxu0 0.0
    %768 = vmatprep.subr.mxu0 0.0
    %769 = vmatpush2.msra.mxu0 0.0
    %770 = vmatprep.subr.mxu0 0.0
    %771 = vmatpush2.msra.mxu0 0.0
    %772 = vmatprep.subr.mxu0 0.0
    %773 = vmatpush2.msra.mxu0 0.0
    %774 = vmatprep.subr.mxu0 0.0
    %775 = vmatpush2.msra.mxu0 0.0
    %776 = vmatprep.subr.mxu0 0.0
    %777 = vmatpush2.msra.mxu0 0.0
    %778 = vmatprep.subr.mxu0 0.0
    %779 = vmatpush2.msra.mxu0 0.0
    %780 = vmatprep.subr.mxu0 0.0
    %781 = vmatpush2.msra.mxu0 0.0
    %782 = vmatprep.subr.mxu0 0.0
    %783 = vmatpush2.msra.mxu0 0.0
    %784 = vmatprep.subr.mxu0 0.0
    %785 = vmatpush2.msra.mxu0 0.0
    %786 = vmatprep.subr.mxu0 0.0
    %787 = vmatpush2.msra.mxu0 0.0
    %788 = vmatprep.subr.mxu0 0.0
    %789 = vmatpush2.msra.mxu0 0.0
    %790 = vmatprep.subr.mxu0 0.0
    %791 = vmatpush2.msra.mxu0 0.0
    %792 = vmatprep.subr.mxu0 0.0
    %793 = vmatpush2.msra.mxu0 0.0
    %794 = vmatprep.subr.mxu0 0.0
    %795 = vmatpush2.msra.mxu0 0.0
    %796 = vmatprep.subr.mxu0 0.0
    %797 = vmatpush2.msra.mxu0 0.0
    %798 = vmatprep.mubr.f32.mxu0 0.0
    %799 = vmatmul.mubr.f32.gmra.mxu0 %v657
    %v800 = vpop.f32.mrf.mxu0
    %v801 = vadd.f32 0.0, %v800
    %v802 = vpop.f32.mrf.mxu0
    %v803 = vadd.f32 0.0, %v802
    %804 = vdwg.mxu0
    %v809 = vcombine.low %v730, %v732
    %v810 = vcombine.low %v801, %v803
    %v812 = vunpack.c.l.s4 1966171168
    %v813 = vunpack.c.0.s8 %v812
    %v814 = vlaneseq
    %v815 = vshrl.u32 %v814, 7
    %v816 = vsub.s32 %v813, %v815
    %v817 = vrot.slane %v809, %v816
    %v819 = vunpack.c.l.s4 1966171168
    %v820 = vunpack.c.0.s8 %v819
    %v821 = vlaneseq
    %v822 = vshrl.u32 %v821, 7
    %v823 = vsub.s32 %v820, %v822
    %v824 = vrot.slane %v810, %v823
    %v825 = vcombine.low %v817, %v824
    %v827 = vunpack.c.l.s4 1966171168
    %v828 = vunpack.c.0.s8 %v827
    %v829 = vlaneseq
    %v830 = vshrl.u32 %v829, 7
    %v831 = vsub.s32 %v828, %v830
    %v832 = vrot.slane %v825, %v831
    %v834 = vadd.f32 %v662, %v832
    %v835 = vxor.u32 %v834, 2147483648
    %v836 = vmul.f32 %v835, 1.442695
    %v837 = vpow.pop %v836
    %v838 = vadd.f32 %v837, 1.0
    %v839 = vrcp.pop %v838
    %v840 = vmul.f32 1.0, %v839
    %v842 = vrot.slane %v834, 3
    %v844 = vtanh.pop %v842
    %v846 = vrot.slane %v840, 1
    %v848 = vmul.f32 %v846, %v658
    %v849 = vmul.f32 %v840, %v844
    %v850 = vadd.f32 %v848, %v849
    %v851 = vtanh.pop %v850
    %v852 = vrot.slane %v840, 2
    %v854 = vmul.f32 %v852, %v851
    %855 = vmatprep.subr.mxu0 %v453
    %856 = vmatpush1.msra.mxu0 %v452
    %857 = vmatprep.subr.mxu0 %v449
    %858 = vmatpush1.msra.mxu0 %v448
    %859 = vmatprep.subr.mxu0 %v445
    %860 = vmatpush1.msra.mxu0 %v444
    %861 = vmatprep.subr.mxu0 %v441
    %862 = vmatpush1.msra.mxu0 %v440
    %863 = vmatprep.subr.mxu0 %v437
    %864 = vmatpush1.msra.mxu0 %v436
    %865 = vmatprep.subr.mxu0 %v433
    %866 = vmatpush1.msra.mxu0 %v432
    %867 = vmatprep.subr.mxu0 %v429
    %868 = vmatpush1.msra.mxu0 %v428
    %869 = vmatprep.subr.mxu0 %v425
    %870 = vmatpush1.msra.mxu0 %v424
    %871 = vmatprep.subr.mxu0 %v421
    %872 = vmatpush1.msra.mxu0 %v420
    %873 = vmatprep.subr.mxu0 %v417
    %874 = vmatpush1.msra.mxu0 %v416
    %875 = vmatprep.subr.mxu0 %v413
    %876 = vmatpush1.msra.mxu0 %v412
    %877 = vmatprep.subr.mxu0 %v409
    %878 = vmatpush1.msra.mxu0 %v408
    %879 = vmatprep.subr.mxu0 %v405
    %880 = vmatpush1.msra.mxu0 %v404
    %881 = vmatprep.subr.mxu0 %v401
    %882 = vmatpush1.msra.mxu0 %v400
    %883 = vmatprep.subr.mxu0 %v397
    %884 = vmatpush1.msra.mxu0 %v396
    %885 = vmatprep.subr.mxu0 %v393
    %886 = vmatpush1.msra.mxu0 %v392
    %887 = vmatprep.subr.mxu0 0.0
    %888 = vmatpush2.msra.mxu0 0.0
    %889 = vmatprep.subr.mxu0 0.0
    %890 = vmatpush2.msra.mxu0 0.0
    %891 = vmatprep.subr.mxu0 0.0
    %892 = vmatpush2.msra.mxu0 0.0
    %893 = vmatprep.subr.mxu0 0.0
    %894 = vmatpush2.msra.mxu0 0.0
    %895 = vmatprep.subr.mxu0 0.0
    %896 = vmatpush2.msra.mxu0 0.0
    %897 = vmatprep.subr.mxu0 0.0
    %898 = vmatpush2.msra.mxu0 0.0
    %899 = vmatprep.subr.mxu0 0.0
    %900 = vmatpush2.msra.mxu0 0.0
    %901 = vmatprep.subr.mxu0 0.0
    %902 = vmatpush2.msra.mxu0 0.0
    %903 = vmatprep.subr.mxu0 0.0
    %904 = vmatpush2.msra.mxu0 0.0
    %905 = vmatprep.subr.mxu0 0.0
    %906 = vmatpush2.msra.mxu0 0.0
    %907 = vmatprep.subr.mxu0 0.0
    %908 = vmatpush2.msra.mxu0 0.0
    %909 = vmatprep.subr.mxu0 0.0
    %910 = vmatpush2.msra.mxu0 0.0
    %911 = vmatprep.subr.mxu0 0.0
    %912 = vmatpush2.msra.mxu0 0.0
    %913 = vmatprep.subr.mxu0 0.0
    %914 = vmatpush2.msra.mxu0 0.0
    %915 = vmatprep.subr.mxu0 0.0
    %916 = vmatpush2.msra.mxu0 0.0
    %917 = vmatprep.subr.mxu0 0.0
    %918 = vmatpush2.msra.mxu0 0.0
    %919 = vmatprep.mubr.f32.mxu0 0.0
    %920 = vmatmul.mubr.f32.gmra.mxu0 %v659
    %v921 = vpop.f32.mrf.mxu0
    %v922 = vadd.f32 0.0, %v921
    %v923 = vpop.f32.mrf.mxu0
    %v924 = vadd.f32 0.0, %v923
    %925 = vdwg.mxu0
    %926 = vmatprep.subr.mxu0 %v455
    %927 = vmatpush1.msra.mxu0 %v454
    %928 = vmatprep.subr.mxu0 %v451
    %929 = vmatpush1.msra.mxu0 %v450
    %930 = vmatprep.subr.mxu0 %v447
    %931 = vmatpush1.msra.mxu0 %v446
    %932 = vmatprep.subr.mxu0 %v443
    %933 = vmatpush1.msra.mxu0 %v442
    %934 = vmatprep.subr.mxu0 %v439
    %935 = vmatpush1.msra.mxu0 %v438
    %936 = vmatprep.subr.mxu0 %v435
    %937 = vmatpush1.msra.mxu0 %v434
    %938 = vmatprep.subr.mxu0 %v431
    %939 = vmatpush1.msra.mxu0 %v430
    %940 = vmatprep.subr.mxu0 %v427
    %941 = vmatpush1.msra.mxu0 %v426
    %942 = vmatprep.subr.mxu0 %v423
    %943 = vmatpush1.msra.mxu0 %v422
    %944 = vmatprep.subr.mxu0 %v419
    %945 = vmatpush1.msra.mxu0 %v418
    %946 = vmatprep.subr.mxu0 %v415
    %947 = vmatpush1.msra.mxu0 %v414
    %948 = vmatprep.subr.mxu0 %v411
    %949 = vmatpush1.msra.mxu0 %v410
    %950 = vmatprep.subr.mxu0 %v407
    %951 = vmatpush1.msra.mxu0 %v406
    %952 = vmatprep.subr.mxu0 %v403
    %953 = vmatpush1.msra.mxu0 %v402
    %954 = vmatprep.subr.mxu0 %v399
    %955 = vmatpush1.msra.mxu0 %v398
    %956 = vmatprep.subr.mxu0 %v395
    %957 = vmatpush1.msra.mxu0 %v394
    %958 = vmatprep.subr.mxu0 0.0
    %959 = vmatpush2.msra.mxu0 0.0
    %960 = vmatprep.subr.mxu0 0.0
    %961 = vmatpush2.msra.mxu0 0.0
    %962 = vmatprep.subr.mxu0 0.0
    %963 = vmatpush2.msra.mxu0 0.0
    %964 = vmatprep.subr.mxu0 0.0
    %965 = vmatpush2.msra.mxu0 0.0
    %966 = vmatprep.subr.mxu0 0.0
    %967 = vmatpush2.msra.mxu0 0.0
    %968 = vmatprep.subr.mxu0 0.0
    %969 = vmatpush2.msra.mxu0 0.0
    %970 = vmatprep.subr.mxu0 0.0
    %971 = vmatpush2.msra.mxu0 0.0
    %972 = vmatprep.subr.mxu0 0.0
    %973 = vmatpush2.msra.mxu0 0.0
    %974 = vmatprep.subr.mxu0 0.0
    %975 = vmatpush2.msra.mxu0 0.0
    %976 = vmatprep.subr.mxu0 0.0
    %977 = vmatpush2.msra.mxu0 0.0
    %978 = vmatprep.subr.mxu0 0.0
    %979 = vmatpush2.msra.mxu0 0.0
    %980 = vmatprep.subr.mxu0 0.0
    %981 = vmatpush2.msra.mxu0 0.0
    %982 = vmatprep.subr.mxu0 0.0
    %983 = vmatpush2.msra.mxu0 0.0
    %984 = vmatprep.subr.mxu0 0.0
    %985 = vmatpush2.msra.mxu0 0.0
    %986 = vmatprep.subr.mxu0 0.0
    %987 = vmatpush2.msra.mxu0 0.0
    %988 = vmatprep.subr.mxu0 0.0
    %989 = vmatpush2.msra.mxu0 0.0
    %990 = vmatprep.mubr.f32.mxu0 0.0
    %991 = vmatmul.mubr.f32.gmra.mxu0 %v659
    %v992 = vpop.f32.mrf.mxu0
    %v993 = vadd.f32 0.0, %v992
    %v994 = vpop.f32.mrf.mxu0
    %v995 = vadd.f32 0.0, %v994
    %996 = vdwg.mxu0
    %997 = vmatprep.subr.mxu0 %v389
    %998 = vmatpush1.msra.mxu0 %v388
    %999 = vmatprep.subr.mxu0 %v385
    %1000 = vmatpush1.msra.mxu0 %v384
    %1001 = vmatprep.subr.mxu0 %v381
    %1002 = vmatpush1.msra.mxu0 %v380
    %1003 = vmatprep.subr.mxu0 %v377
    %1004 = vmatpush1.msra.mxu0 %v376
    %1005 = vmatprep.subr.mxu0 %v373
    %1006 = vmatpush1.msra.mxu0 %v372
    %1007 = vmatprep.subr.mxu0 %v369
    %1008 = vmatpush1.msra.mxu0 %v368
    %1009 = vmatprep.subr.mxu0 %v365
    %1010 = vmatpush1.msra.mxu0 %v364
    %1011 = vmatprep.subr.mxu0 %v361
    %1012 = vmatpush1.msra.mxu0 %v360
    %1013 = vmatprep.subr.mxu0 %v357
    %1014 = vmatpush1.msra.mxu0 %v356
    %1015 = vmatprep.subr.mxu0 %v353
    %1016 = vmatpush1.msra.mxu0 %v352
    %1017 = vmatprep.subr.mxu0 %v349
    %1018 = vmatpush1.msra.mxu0 %v348
    %1019 = vmatprep.subr.mxu0 %v345
    %1020 = vmatpush1.msra.mxu0 %v344
    %1021 = vmatprep.subr.mxu0 %v341
    %1022 = vmatpush1.msra.mxu0 %v340
    %1023 = vmatprep.subr.mxu0 %v337
    %1024 = vmatpush1.msra.mxu0 %v336
    %1025 = vmatprep.subr.mxu0 %v333
    %1026 = vmatpush1.msra.mxu0 %v332
    %1027 = vmatprep.subr.mxu0 %v329
    %1028 = vmatpush1.msra.mxu0 %v328
    %1029 = vmatprep.subr.mxu0 0.0
    %1030 = vmatpush2.msra.mxu0 0.0
    %1031 = vmatprep.subr.mxu0 0.0
    %1032 = vmatpush2.msra.mxu0 0.0
    %1033 = vmatprep.subr.mxu0 0.0
    %1034 = vmatpush2.msra.mxu0 0.0
    %1035 = vmatprep.subr.mxu0 0.0
    %1036 = vmatpush2.msra.mxu0 0.0
    %1037 = vmatprep.subr.mxu0 0.0
    %1038 = vmatpush2.msra.mxu0 0.0
    %1039 = vmatprep.subr.mxu0 0.0
    %1040 = vmatpush2.msra.mxu0 0.0
    %1041 = vmatprep.subr.mxu0 0.0
    %1042 = vmatpush2.msra.mxu0 0.0
    %1043 = vmatprep.subr.mxu0 0.0
    %1044 = vmatpush2.msra.mxu0 0.0
    %1045 = vmatprep.subr.mxu0 0.0
    %1046 = vmatpush2.msra.mxu0 0.0
    %1047 = vmatprep.subr.mxu0 0.0
    %1048 = vmatpush2.msra.mxu0 0.0
    %1049 = vmatprep.subr.mxu0 0.0
    %1050 = vmatpush2.msra.mxu0 0.0
    %1051 = vmatprep.subr.mxu0 0.0
    %1052 = vmatpush2.msra.mxu0 0.0
    %1053 = vmatprep.subr.mxu0 0.0
    %1054 = vmatpush2.msra.mxu0 0.0
    %1055 = vmatprep.subr.mxu0 0.0
    %1056 = vmatpush2.msra.mxu0 0.0
    %1057 = vmatprep.subr.mxu0 0.0
    %1058 = vmatpush2.msra.mxu0 0.0
    %1059 = vmatprep.subr.mxu0 0.0
    %1060 = vmatpush2.msra.mxu0 0.0
    %1061 = vmatprep.mubr.f32.mxu0 0.0
    %1062 = vmatmul.mubr.f32.gmra.mxu0 %v854
    %v1063 = vpop.f32.mrf.mxu0
    %v1064 = vadd.f32 %v922, %v1063
    %v1065 = vpop.f32.mrf.mxu0
    %v1066 = vadd.f32 %v924, %v1065
    %1067 = vdwg.mxu0
    %1068 = vmatprep.subr.mxu0 %v391
    %1069 = vmatpush1.msra.mxu0 %v390
    %1070 = vmatprep.subr.mxu0 %v387
    %1071 = vmatpush1.msra.mxu0 %v386
    %1072 = vmatprep.subr.mxu0 %v383
    %1073 = vmatpush1.msra.mxu0 %v382
    %1074 = vmatprep.subr.mxu0 %v379
    %1075 = vmatpush1.msra.mxu0 %v378
    %1076 = vmatprep.subr.mxu0 %v375
    %1077 = vmatpush1.msra.mxu0 %v374
    %1078 = vmatprep.subr.mxu0 %v371
    %1079 = vmatpush1.msra.mxu0 %v370
    %1080 = vmatprep.subr.mxu0 %v367
    %1081 = vmatpush1.msra.mxu0 %v366
    %1082 = vmatprep.subr.mxu0 %v363
    %1083 = vmatpush1.msra.mxu0 %v362
    %1084 = vmatprep.subr.mxu0 %v359
    %1085 = vmatpush1.msra.mxu0 %v358
    %1086 = vmatprep.subr.mxu0 %v355
    %1087 = vmatpush1.msra.mxu0 %v354
    %1088 = vmatprep.subr.mxu0 %v351
    %1089 = vmatpush1.msra.mxu0 %v350
    %1090 = vmatprep.subr.mxu0 %v347
    %1091 = vmatpush1.msra.mxu0 %v346
    %1092 = vmatprep.subr.mxu0 %v343
    %1093 = vmatpush1.msra.mxu0 %v342
    %1094 = vmatprep.subr.mxu0 %v339
    %1095 = vmatpush1.msra.mxu0 %v338
    %1096 = vmatprep.subr.mxu0 %v335
    %1097 = vmatpush1.msra.mxu0 %v334
    %1098 = vmatprep.subr.mxu0 %v331
    %1099 = vmatpush1.msra.mxu0 %v330
    %1100 = vmatprep.subr.mxu0 0.0
    %1101 = vmatpush2.msra.mxu0 0.0
    %1102 = vmatprep.subr.mxu0 0.0
    %1103 = vmatpush2.msra.mxu0 0.0
    %1104 = vmatprep.subr.mxu0 0.0
    %1105 = vmatpush2.msra.mxu0 0.0
    %1106 = vmatprep.subr.mxu0 0.0
    %1107 = vmatpush2.msra.mxu0 0.0
    %1108 = vmatprep.subr.mxu0 0.0
    %1109 = vmatpush2.msra.mxu0 0.0
    %1110 = vmatprep.subr.mxu0 0.0
    %1111 = vmatpush2.msra.mxu0 0.0
    %1112 = vmatprep.subr.mxu0 0.0
    %1113 = vmatpush2.msra.mxu0 0.0
    %1114 = vmatprep.subr.mxu0 0.0
    %1115 = vmatpush2.msra.mxu0 0.0
    %1116 = vmatprep.subr.mxu0 0.0
    %1117 = vmatpush2.msra.mxu0 0.0
    %1118 = vmatprep.subr.mxu0 0.0
    %1119 = vmatpush2.msra.mxu0 0.0
    %1120 = vmatprep.subr.mxu0 0.0
    %1121 = vmatpush2.msra.mxu0 0.0
    %1122 = vmatprep.subr.mxu0 0.0
    %1123 = vmatpush2.msra.mxu0 0.0
    %1124 = vmatprep.subr.mxu0 0.0
    %1125 = vmatpush2.msra.mxu0 0.0
    %1126 = vmatprep.subr.mxu0 0.0
    %1127 = vmatpush2.msra.mxu0 0.0
    %1128 = vmatprep.subr.mxu0 0.0
    %1129 = vmatpush2.msra.mxu0 0.0
    %1130 = vmatprep.subr.mxu0 0.0
    %1131 = vmatpush2.msra.mxu0 0.0
    %1132 = vmatprep.mubr.f32.mxu0 0.0
    %1133 = vmatmul.mubr.f32.gmra.mxu0 %v854
    %v1134 = vpop.f32.mrf.mxu0
    %v1135 = vadd.f32 %v993, %v1134
    %v1136 = vpop.f32.mrf.mxu0
    %v1137 = vadd.f32 %v995, %v1136
    %1138 = vdwg.mxu0
    %v1140 = vlaneseq
    %v1141 = vshrl.u32 %v1140, 7
    %v1142 = vsub.s32 0, %v1141
    %v1143 = vrot.slane %v459, %v1142
    %v1144 = vlaneseq
    %v1145 = vshrl.u32 %v1144, 7
    %v1146 = vsub.s32 1, %v1145
    %v1147 = vrot.slane %v459, %v1146
    %v1148 = vlaneseq
    %v1149 = vshrl.u32 %v1148, 7
    %v1150 = vsub.s32 2, %v1149
    %v1151 = vrot.slane %v459, %v1150
    %v1152 = vlaneseq
    %v1153 = vshrl.u32 %v1152, 7
    %v1154 = vsub.s32 3, %v1153
    %v1155 = vrot.slane %v459, %v1154
    %v1160 = vadd.f32 %v1064, %v1143
    %v1161 = vadd.f32 %v1066, %v1147
    %v1162 = vadd.f32 %v1135, %v1151
    %v1163 = vadd.f32 %v1137, %v1155
    %v1164 = vxor.u32 %v1160, 2147483648
    %v1165 = vxor.u32 %v1161, 2147483648
    %v1166 = vxor.u32 %v1162, 2147483648
    %v1167 = vmul.f32 %v1164, 1.442695
    %v1168 = vpow.pop %v1167
    %v1169 = vmul.f32 %v1165, 1.442695
    %v1170 = vpow.pop %v1169
    %v1171 = vmul.f32 %v1166, 1.442695
    %v1172 = vpow.pop %v1171
    %v1173 = vadd.f32 %v1168, 1.0
    %v1174 = vadd.f32 %v1170, 1.0
    %v1175 = vadd.f32 %v1172, 1.0
    %v1176 = vrcp.pop %v1173
    %v1177 = vmul.f32 1.0, %v1176
    %v1178 = vrcp.pop %v1174
    %v1179 = vmul.f32 1.0, %v1178
    %v1180 = vrcp.pop %v1175
    %v1181 = vmul.f32 1.0, %v1180
    %v1182 = vtanh.pop %v1163
    %v1183 = vmul.f32 %v1179, %v660
    %v1184 = vmul.f32 %v1177, %v1182
    %v1185 = vadd.f32 %v1183, %v1184
    %v1186 = vtanh.pop %v1185
    %v1187 = vmul.f32 %v1181, %v1186
    %1188 = vst [vmem:[#allocation4] sm:$0x1] %v1187
    %s1189 = scalar_select %p661, 1, 0
    %v1190 = vstv %s1189
    %vm1191 = vcmp.eq.s32.totalorder %v1190, 1
    %v1192 = vsel %vm1191, %v854, %v657
    %v1193 = vsel %vm1191, %v850, %v658
    %v1194 = vsel %vm1191, %v1187, %v659
    %v1195 = vsel %vm1191, %v1185, %v660
    %1196 = vst [vmem:[#allocation2] sm:$0x1] %v1192
    %1197 = vst [vmem:[#allocation2 + $0x1] sm:$0x1] %v1193
    %1198 = vst [vmem:[#allocation2 + $0x2] sm:$0x1] %v1194
    %1199 = vst [vmem:[#allocation2 + $0x3] sm:$0x1] %v1195
    %v1200 = vld [vmem:[#allocation10 + $0x80] sm:$0xff]
    %v1201 = vld [vmem:[#allocation10 + $0x88] sm:$0xff]
    %v1202 = vld [vmem:[#allocation10 + $0x90] sm:$0xff]
    %v1203 = vld [vmem:[#allocation10 + $0x98] sm:$0xff]
    %v1204 = vld [vmem:[#allocation10 + $0xa0] sm:$0xff]
    %v1205 = vld [vmem:[#allocation10 + $0xa8] sm:$0xff]
    %v1206 = vld [vmem:[#allocation10 + $0xb0] sm:$0xff]
    %v1207 = vld [vmem:[#allocation10 + $0xb8] sm:$0xff]
    %v1208 = vld [vmem:[#allocation10 + $0xc0] sm:$0xff]
    %v1209 = vld [vmem:[#allocation10 + $0xc8] sm:$0xff]
    %v1210 = vld [vmem:[#allocation10 + $0xd0] sm:$0xff]
    %v1211 = vld [vmem:[#allocation10 + $0xd8] sm:$0xff]
    %v1212 = vld [vmem:[#allocation10 + $0xe0] sm:$0xff]
    %v1213 = vld [vmem:[#allocation10 + $0xe8] sm:$0xff]
    %v1214 = vld [vmem:[#allocation10 + $0xf0] sm:$0xff]
    %v1215 = vld [vmem:[#allocation10 + $0xf8] sm:$0xff]
    %v1216 = vld [vmem:[#allocation10 + $0x102] sm:$0x1]
    %v1217 = vld [vmem:[#allocation4] sm:$0x1]
    %1218 = vmatprep.subr.mxu0 0.0
    %1219 = vmatpush1.msra.mxu0 %v1215
    %1220 = vmatprep.subr.mxu0 0.0
    %1221 = vmatpush1.msra.mxu0 %v1214
    %1222 = vmatprep.subr.mxu0 0.0
    %1223 = vmatpush1.msra.mxu0 %v1213
    %1224 = vmatprep.subr.mxu0 0.0
    %1225 = vmatpush1.msra.mxu0 %v1212
    %1226 = vmatprep.subr.mxu0 0.0
    %1227 = vmatpush1.msra.mxu0 %v1211
    %1228 = vmatprep.subr.mxu0 0.0
    %1229 = vmatpush1.msra.mxu0 %v1210
    %1230 = vmatprep.subr.mxu0 0.0
    %1231 = vmatpush1.msra.mxu0 %v1209
    %1232 = vmatprep.subr.mxu0 0.0
    %1233 = vmatpush1.msra.mxu0 %v1208
    %1234 = vmatprep.subr.mxu0 0.0
    %1235 = vmatpush1.msra.mxu0 %v1207
    %1236 = vmatprep.subr.mxu0 0.0
    %1237 = vmatpush1.msra.mxu0 %v1206
    %1238 = vmatprep.subr.mxu0 0.0
    %1239 = vmatpush1.msra.mxu0 %v1205
    %1240 = vmatprep.subr.mxu0 0.0
    %1241 = vmatpush1.msra.mxu0 %v1204
    %1242 = vmatprep.subr.mxu0 0.0
    %1243 = vmatpush1.msra.mxu0 %v1203
    %1244 = vmatprep.subr.mxu0 0.0
    %1245 = vmatpush1.msra.mxu0 %v1202
    %1246 = vmatprep.subr.mxu0 0.0
    %1247 = vmatpush1.msra.mxu0 %v1201
    %1248 = vmatprep.subr.mxu0 0.0
    %1249 = vmatpush1.msra.mxu0 %v1200
    %1250 = vmatprep.subr.mxu0 0.0
    %1251 = vmatpush2.msra.mxu0 0.0
    %1252 = vmatprep.subr.mxu0 0.0
    %1253 = vmatpush2.msra.mxu0 0.0
    %1254 = vmatprep.subr.mxu0 0.0
    %1255 = vmatpush2.msra.mxu0 0.0
    %1256 = vmatprep.subr.mxu0 0.0
    %1257 = vmatpush2.msra.mxu0 0.0
    %1258 = vmatprep.subr.mxu0 0.0
    %1259 = vmatpush2.msra.mxu0 0.0
    %1260 = vmatprep.subr.mxu0 0.0
    %1261 = vmatpush2.msra.mxu0 0.0
    %1262 = vmatprep.subr.mxu0 0.0
    %1263 = vmatpush2.msra.mxu0 0.0
    %1264 = vmatprep.subr.mxu0 0.0
    %1265 = vmatpush2.msra.mxu0 0.0
    %1266 = vmatprep.subr.mxu0 0.0
    %1267 = vmatpush2.msra.mxu0 0.0
    %1268 = vmatprep.subr.mxu0 0.0
    %1269 = vmatpush2.msra.mxu0 0.0
    %1270 = vmatprep.subr.mxu0 0.0
    %1271 = vmatpush2.msra.mxu0 0.0
    %1272 = vmatprep.subr.mxu0 0.0
    %1273 = vmatpush2.msra.mxu0 0.0
    %1274 = vmatprep.subr.mxu0 0.0
    %1275 = vmatpush2.msra.mxu0 0.0
    %1276 = vmatprep.subr.mxu0 0.0
    %1277 = vmatpush2.msra.mxu0 0.0
    %1278 = vmatprep.subr.mxu0 0.0
    %1279 = vmatpush2.msra.mxu0 0.0
    %1280 = vmatprep.subr.mxu0 0.0
    %1281 = vmatpush2.msra.mxu0 0.0
    %1282 = vmatprep.mubr.f32.mxu0 0.0
    %1283 = vmatmul.mubr.f32.gmra.mxu0 %v1217
    %v1284 = vpop.f32.mrf.mxu0
    %v1285 = vadd.f32 %v1216, %v1284
    %v1286 = vpop.f32.mrf.mxu0
    %1287 = vdwg.mxu0
    %v1288 = vxor.u32 %v1285, 2147483648
    %v1289 = vmul.f32 %v1288, 1.442695
    %v1290 = vpow.pop %v1289
    %v1291 = vadd.f32 %v1290, 1.0
    %v1292 = vrcp.pop %v1291
    %v1293 = vmul.f32 1.0, %v1292
    %v1294 = vmul.f32 %v1293, %v178
    %v1295 = vld [vmem:[#allocation13] sm:$0xff]
    %v1296 = vld [vmem:[#allocation13 + $0x8] sm:$0xff]
    %v1297 = vld [vmem:[#allocation13 + $0x10] sm:$0xff]
    %v1298 = vld [vmem:[#allocation13 + $0x18] sm:$0xff]
    %v1299 = vld [vmem:[#allocation13 + $0x20] sm:$0xff]
    %v1300 = vld [vmem:[#allocation13 + $0x28] sm:$0xff]
    %v1301 = vld [vmem:[#allocation13 + $0x30] sm:$0xff]
    %v1302 = vld [vmem:[#allocation13 + $0x38] sm:$0xff]
    %v1303 = vld [vmem:[#allocation13 + $0x40] sm:$0xff]
    %v1304 = vld [vmem:[#allocation13 + $0x48] sm:$0xff]
    %v1305 = vld [vmem:[#allocation13 + $0x50] sm:$0xff]
    %v1306 = vld [vmem:[#allocation13 + $0x58] sm:$0xff]
    %v1307 = vld [vmem:[#allocation13 + $0x60] sm:$0xff]
    %v1308 = vld [vmem:[#allocation13 + $0x68] sm:$0xff]
    %v1309 = vld [vmem:[#allocation13 + $0x70] sm:$0xff]
    %v1310 = vld [vmem:[#allocation13 + $0x78] sm:$0xff]
    %1311 = vmatprep.subr.mxu0 0.0
    %1312 = vmatpush1.msra.mxu0 %v1310
    %1313 = vmatprep.subr.mxu0 0.0
    %1314 = vmatpush1.msra.mxu0 %v1309
    %1315 = vmatprep.subr.mxu0 0.0
    %1316 = vmatpush1.msra.mxu0 %v1308
    %1317 = vmatprep.subr.mxu0 0.0
    %1318 = vmatpush1.msra.mxu0 %v1307
    %1319 = vmatprep.subr.mxu0 0.0
    %1320 = vmatpush1.msra.mxu0 %v1306
    %1321 = vmatprep.subr.mxu0 0.0
    %1322 = vmatpush1.msra.mxu0 %v1305
    %1323 = vmatprep.subr.mxu0 0.0
    %1324 = vmatpush1.msra.mxu0 %v1304
    %1325 = vmatprep.subr.mxu0 0.0
    %1326 = vmatpush1.msra.mxu0 %v1303
    %1327 = vmatprep.subr.mxu0 0.0
    %1328 = vmatpush1.msra.mxu0 %v1302
    %1329 = vmatprep.subr.mxu0 0.0
    %1330 = vmatpush1.msra.mxu0 %v1301
    %1331 = vmatprep.subr.mxu0 0.0
    %1332 = vmatpush1.msra.mxu0 %v1300
    %1333 = vmatprep.subr.mxu0 0.0
    %1334 = vmatpush1.msra.mxu0 %v1299
    %1335 = vmatprep.subr.mxu0 0.0
    %1336 = vmatpush1.msra.mxu0 %v1298
    %1337 = vmatprep.subr.mxu0 0.0
    %1338 = vmatpush1.msra.mxu0 %v1297
    %1339 = vmatprep.subr.mxu0 0.0
    %1340 = vmatpush1.msra.mxu0 %v1296
    %1341 = vmatprep.subr.mxu0 0.0
    %1342 = vmatpush1.msra.mxu0 %v1295
    %1343 = vmatprep.subr.mxu0 0.0
    %1344 = vmatpush2.msra.mxu0 0.0
    %1345 = vmatprep.subr.mxu0 0.0
    %1346 = vmatpush2.msra.mxu0 0.0
    %1347 = vmatprep.subr.mxu0 0.0
    %1348 = vmatpush2.msra.mxu0 0.0
    %1349 = vmatprep.subr.mxu0 0.0
    %1350 = vmatpush2.msra.mxu0 0.0
    %1351 = vmatprep.subr.mxu0 0.0
    %1352 = vmatpush2.msra.mxu0 0.0
    %1353 = vmatprep.subr.mxu0 0.0
    %1354 = vmatpush2.msra.mxu0 0.0
    %1355 = vmatprep.subr.mxu0 0.0
    %1356 = vmatpush2.msra.mxu0 0.0
    %1357 = vmatprep.subr.mxu0 0.0
    %1358 = vmatpush2.msra.mxu0 0.0
    %1359 = vmatprep.subr.mxu0 0.0
    %1360 = vmatpush2.msra.mxu0 0.0
    %1361 = vmatprep.subr.mxu0 0.0
    %1362 = vmatpush2.msra.mxu0 0.0
    %1363 = vmatprep.subr.mxu0 0.0
    %1364 = vmatpush2.msra.mxu0 0.0
    %1365 = vmatprep.subr.mxu0 0.0
    %1366 = vmatpush2.msra.mxu0 0.0
    %1367 = vmatprep.subr.mxu0 0.0
    %1368 = vmatpush2.msra.mxu0 0.0
    %1369 = vmatprep.subr.mxu0 0.0
    %1370 = vmatpush2.msra.mxu0 0.0
    %1371 = vmatprep.subr.mxu0 0.0
    %1372 = vmatpush2.msra.mxu0 0.0
    %1373 = vmatprep.subr.mxu0 0.0
    %1374 = vmatpush2.msra.mxu0 0.0
    %1375 = vmatprep.mubr.f32.mxu0 0.0
    %1376 = vmatmul.mubr.f32.gmra.mxu0 %v1294
    %v1377 = vpop.f32.mrf.mxu0
    %v1378 = vadd.f32 0.0, %v1377
    %v1379 = vpop.f32.mrf.mxu0
    %1380 = vdwg.mxu0
    %1381 = vst [vmem:[#allocation14] sm:$0x1] %v1378
    // Predicated region
    $region46: #{_dtln_p2_call.1} parent=1 // pred_check
      %p1382 = pneg %p88
    $region47: #{_dtln_p2_call.1} parent=1 // pred_check_branch
      %1384 = sbr.rel (%p1382) target = $region49
    $region48: #{_dtln_p2_call.1} parent=1 // pred_region
      %v1385 = vld [vmem:[#allocation2] sm:$0xf]
      %1386 = vst [vmem:[#allocation15] sm:$0xf] %v1385
    $region49: #{_dtln_p2_call.1} parent=1 // pred_fallthru
      _
    // Predicated region
    $region50: #{_dtln_p2_call.1} parent=1 // pred_check
      _
    $region51: #{_dtln_p2_call.1} parent=1 // pred_check_branch
      %1388 = sbr.rel (0) target = $region53
    $region52: #{_dtln_p2_call.1} parent=1 // pred_region
      %s1390 = ssub.s32 16, 16
      %1391 = vsyncadd [#allocation7], %s1390
      %s1393 = sshll.u32 [#allocation14], 4
      %s1394 = int_to_ptr.vmem [resolvable:$true] %s1393
      %1396 = dma.vmem_to_hbm [thread:$0]  %s1394, 16, %s5, [#allocation7]
    $region53: #{_dtln_p2_call.1} parent=1 // pred_fallthru
      _
    // Predicated region
    $region54: #{_dtln_p2_call.1} parent=1 // pred_check
      _
    $region55: #{_dtln_p2_call.1} parent=1 // pred_check_branch
      %1398 = sbr.rel (0) target = $region57
    $region56: #{_dtln_p2_call.1} parent=1 // pred_region
      %s1400 = ssub.s32 64, 64
      %1401 = vsyncadd [#allocation16], %s1400
      %s1403 = sshll.u32 [#allocation15], 4
      %s1404 = int_to_ptr.vmem [resolvable:$true] %s1403
      %1406 = dma.vmem_to_hbm [thread:$0]  %s1404, 64, %s6, [#allocation16]
    $region57: #{_dtln_p2_call.1} parent=1 // pred_fallthru
      _
    // Predicated region
    $region58: #{_dtln_p2_call.1} parent=1 // pred_check
      _
    $region59: #{_dtln_p2_call.1} parent=1 // pred_check_branch
      %1408 = sbr.rel (0) target = $region61
    $region60: #{_dtln_p2_call.1} parent=1 // pred_region
      %1409 = dma.done [#allocation7], 16
    $region61: #{_dtln_p2_call.1} parent=1 // pred_fallthru
      _
    // Predicated region
    $region62: #{_dtln_p2_call.1} parent=1 // pred_check
      _
    $region63: #{_dtln_p2_call.1} parent=1 // pred_check_branch
      %1411 = sbr.rel (0) target = $region65
    $region64: #{_dtln_p2_call.1} parent=1 // pred_region
      %1412 = dma.done [#allocation16], 64
    $region65: #{_dtln_p2_call.1} parent=1 // pred_fallthru
      _
    %1413 = vsyncpa [#allocation6], 1
    %1414 = vsyncpa [#allocation9], 1
    %1415 = vsyncpa [#allocation12], 1
    %1416 = vsyncpa [#allocation7], 1
    %1417 = vsyncpa [#allocation16], 1

</llo_original>
